<compile_context>
chip_gen: v7x
topology: tpu7x:2x2x1
jax: 0.10.0
libtpu: 0.0.40
codegen_flags: <defaults>
</compile_context>

<pallas_src>
import jax
import jax.numpy as jnp
from jax.experimental import pallas as pl
from jax.experimental.pallas import tpu as pltpu


# ---------------------------------------------------------------------------
# Kernel 1: fused coordinate MLP (body + routing_1 + routing_2)
# ---------------------------------------------------------------------------
def coord_mlp_kernel(x_ref, wb1_ref, bb1_ref, wb2_ref, bb2_ref,
                     wr1a_ref, br1a_ref, wr1b_ref, br1b_ref,
                     wr2a_ref, br2a_ref, wr2b_ref, br2b_ref,
                     wr2c_ref, br2c_ref,
                     emb_ref, rout_ref):
    wb1 = wb1_ref[...]
    bb1 = bb1_ref[...]
    wb2 = wb2_ref[...]
    bb2 = bb2_ref[...]
    wr1a = wr1a_ref[...]
    br1a = br1a_ref[...]
    wr1b = wr1b_ref[...]
    br1b = br1b_ref[...]

    r1_rows = []
    for d in range(x_ref.shape[0]):                      # static unroll, depth = 4
        xd = x_ref[d]                                    # (C, N)
        h1 = jnp.maximum(
            jnp.dot(wb1, xd, preferred_element_type=jnp.float32) + bb1, 0.0)
        ed = jnp.maximum(
            jnp.dot(wb2, h1, preferred_element_type=jnp.float32) + bb2, 0.0)
        emb_ref[d] = ed                                  # (C, N) lane-dense store
        rh = jnp.maximum(
            jnp.dot(wr1a, ed, preferred_element_type=jnp.float32) + br1a, 0.0)
        rd = jnp.dot(wr1b, rh, preferred_element_type=jnp.float32) + br1b   # (1, N)
        r1_rows.append(1.0 / (1.0 + jnp.exp(-rd)))       # sigmoid (exp on EUP)
    r1 = jnp.concatenate(r1_rows, axis=0)                # (4, N)

    g1 = jnp.maximum(
        jnp.dot(wr2a_ref[...], r1, preferred_element_type=jnp.float32)
        + br2a_ref[...], 0.0)                            # (64, N)
    g2 = jnp.maximum(
        jnp.dot(wr2b_ref[...], g1, preferred_element_type=jnp.float32)
        + br2b_ref[...], 0.0)                            # (64, N)
    rt = (jnp.dot(wr2c_ref[...], g2, preferred_element_type=jnp.float32)
          + br2c_ref[...])
    rout_ref[...] = 1.0 / (1.0 + jnp.exp(-rt))           # (E, N) lane-dense


def coord_mlp_pallas(x_loc, pt):
    depth, c, n = x_loc.shape
    E = pt["wr2c_t"].shape[0]
    args = [x_loc,
            pt["wb1_t"], pt["bb1"], pt["wb2_t"], pt["bb2"],
            pt["wr1a_t"], pt["br1a"], pt["wr1b_t"], pt["br1b"],
            pt["wr2a_t"], pt["br2a"], pt["wr2b_t"], pt["br2b"],
            pt["wr2c_t"], pt["br2c"]]
    full2 = lambda i: (0, 0)
    full3 = lambda i: (0, 0, 0)
    in_specs = [pl.BlockSpec(x_loc.shape, full3)]
    in_specs += [pl.BlockSpec(a.shape, full2) for a in args[1:]]
    return pl.pallas_call(
        coord_mlp_kernel,
        out_shape=(jax.ShapeDtypeStruct((depth, c, n), jnp.float32),
                   jax.ShapeDtypeStruct((E, n), jnp.float32)),
        grid=(1,),
        in_specs=in_specs,
        out_specs=(pl.BlockSpec((depth, c, n), full3),
                   pl.BlockSpec((E, n), full2)),
        compiler_params=pltpu.CompilerParams(dimension_semantics=("arbitrary",)),
    )(*args)


# ---------------------------------------------------------------------------
# Kernel 2: offset head (4 -> 64 -> 64 -> 2) with the (C*N) batch on lanes
# ---------------------------------------------------------------------------
def offset_head_kernel(x_ref, wa_ref, ba_ref, wb_ref, bb_ref, wc_ref, bc_ref,
                       out_ref):
    x = x_ref[...]                                       # (4, C*N)
    h1 = jnp.maximum(
        jnp.dot(wa_ref[...], x, preferred_element_type=jnp.float32)
        + ba_ref[...], 0.0)                              # (64, C*N)
    h2 = jnp.maximum(
        jnp.dot(wb_ref[...], h1, preferred_element_type=jnp.float32)
        + bb_ref[...], 0.0)                              # (64, C*N)
    out_ref[...] = (jnp.dot(wc_ref[...], h2, preferred_element_type=jnp.float32)
                    + bc_ref[...])                       # (2, C*N) lane-dense


def offset_head_pallas(off_in, pt):
    _, cn = off_in.shape
    full2 = lambda i: (0, 0)
    args = [off_in, pt["woa_t"], pt["boa"], pt["wob_t"], pt["bob"],
            pt["woc_t"], pt["boc"]]
    return pl.pallas_call(
        offset_head_kernel,
        out_shape=jax.ShapeDtypeStruct((2, cn), jnp.float32),
        grid=(1,),
        in_specs=[pl.BlockSpec(a.shape, full2) for a in args],
        out_specs=pl.BlockSpec((2, cn), full2),
        compiler_params=pltpu.CompilerParams(dimension_semantics=("arbitrary",)),
    )(*args)


# ---------------------------------------------------------------------------
# Kernel 3: expert-mixed compress/expand + residual, output in (B, C, N) layout
#   mid  = sum_e r_e * (Wc_e @ fea)      — one stacked matmul + weighted mix
#   out  = sum_e r_e * (We_e @ mid) + fea
# ---------------------------------------------------------------------------
def expert_kernel(fea_ref, rout_ref, wc_ref, we_ref, out_ref):
    fea = fea_ref[...]                                   # (C, N)
    r = rout_ref[...]                                    # (E, N)
    E = rout_ref.shape[0]
    c = fea_ref.shape[0]
    n = fea_ref.shape[1]
    c8 = we_ref.shape[1]

    mid_all = jnp.dot(wc_ref[...], fea,
                      preferred_element_type=jnp.float32)        # (E*c8, N)
    mid = jnp.zeros((c8, n), jnp.float32)
    for e in range(E):
        mid = mid + r[e:e + 1, :] * mid_all[e * c8:(e + 1) * c8, :]

    out_all = jnp.dot(we_ref[...], mid,
                      preferred_element_type=jnp.float32)        # (E*C, N)
    out = jnp.zeros((c, n), jnp.float32)
    for e in range(E):
        out = out + r[e:e + 1, :] * out_all[e * c:(e + 1) * c, :]

    out_ref[...] = out + fea                             # (C, N) lane-dense store


def expert_pallas(fea_cn, routing, wc_all, we_all):
    b, c, n = fea_cn.shape
    return pl.pallas_call(
        expert_kernel,
        out_shape=jax.ShapeDtypeStruct((b, c, n), jnp.float32),
        grid=(b,),
        in_specs=[pl.BlockSpec((None, c, n), lambda i: (i, 0, 0)),
                  pl.BlockSpec(routing.shape, lambda i: (0, 0)),
                  pl.BlockSpec(wc_all.shape, lambda i: (0, 0)),
                  pl.BlockSpec(we_all.shape, lambda i: (0, 0))],
        out_specs=pl.BlockSpec((None, c, n), lambda i: (i, 0, 0)),
        compiler_params=pltpu.CompilerParams(dimension_semantics=("parallel",)),
    )(fea_cn, routing, wc_all, we_all)


# ---------------------------------------------------------------------------
# Plain-JAX glue
# ---------------------------------------------------------------------------
def build_coord_vectors(h, w, scale):
    Hs, Ws = int(round(h * scale)), int(round(w * scale))
    ih = jnp.arange(Hs, dtype=jnp.float32)
    iw = jnp.arange(Ws, dtype=jnp.float32)
    coor_h = (ih + 0.5) / scale - jnp.floor((ih + 0.5) / scale + 0.001) - 0.5
    coor_w = (iw + 0.5) / scale - jnp.floor((iw + 0.5) / scale + 0.001) - 0.5
    return coor_h, coor_w


def grid_sample_zeros_per_channel(x, off_x, off_y, scale):
    # TODO(synk): F.grid_sample bilinear gather (data-dependent, per-channel) kept in
    # XLA; a Pallas version would need manual DMA gather of the 4 corner rows.
    # Matches F.grid_sample(padding_mode='zeros', align_corners=True) with the grid
    # built in the PyTorch helper:  ix = (j+0.5)/scale - 0.5 + off_x[ch,i,j].
    b, c, h, w = x.shape
    _, Hs, Ws = off_x.shape
    jj = jnp.arange(Ws, dtype=jnp.float32)
    ii = jnp.arange(Hs, dtype=jnp.float32)
    ix = (jj[None, None, :] + 0.5) / scale - 0.5 + off_x          # (c, Hs, Ws)
    iy = (ii[None, :, None] + 0.5) / scale - 0.5 + off_y          # (c, Hs, Ws)
    x0 = jnp.floor(ix)
    y0 = jnp.floor(iy)
    ch = jnp.arange(c)[:, None, None]

    def corner(xi, yi):
        valid = (xi >= 0) & (xi <= w - 1) & (yi >= 0) & (yi <= h - 1)
        xc = jnp.clip(xi, 0, w - 1).astype(jnp.int32)
        yc = jnp.clip(yi, 0, h - 1).astype(jnp.int32)
        return x[:, ch, yc, xc] * valid.astype(x.dtype)[None]

    wx1 = ix - x0
    wx0 = 1.0 - wx1
    wy1 = iy - y0
    wy0 = 1.0 - wy1
    return (corner(x0, y0) * (wx0 * wy0)[None]
            + corner(x0 + 1, y0) * (wx1 * wy0)[None]
            + corner(x0, y0 + 1) * (wx0 * wy1)[None]
            + corner(x0 + 1, y0 + 1) * (wx1 * wy1)[None])


def prep_kernel_params(p):
    t = lambda w: jnp.asarray(w.T, jnp.float32)          # (out, in)
    col = lambda v: jnp.asarray(v, jnp.float32).reshape(-1, 1)
    return {
        "wb1_t": t(p["w_b1"]), "bb1": col(p["b_b1"]),
        "wb2_t": t(p["w_b2"]), "bb2": col(p["b_b2"]),
        "wr1a_t": t(p["w_r1a"]), "br1a": col(p["b_r1a"]),
        "wr1b_t": t(p["w_r1b"]), "br1b": col(p["b_r1b"]),
        "wr2a_t": t(p["w_r2a"]), "br2a": col(p["b_r2a"]),
        "wr2b_t": t(p["w_r2b"]), "br2b": col(p["b_r2b"]),
        "wr2c_t": t(p["w_r2c"]), "br2c": col(p["b_r2c"]),
        "woa_t": t(p["w_oa"]), "boa": col(p["b_oa"]),
        "wob_t": t(p["w_ob"]), "bob": col(p["b_ob"]),
        "woc_t": t(p["w_oc"]), "boc": col(p["b_oc"]),
        "wc_all": jnp.asarray(p["wc"], jnp.float32).reshape(-1, p["wc"].shape[-1]),
        "we_all": jnp.asarray(p["we"], jnp.float32).reshape(-1, p["we"].shape[-1]),
    }


def band_attn_meta_upsample_forward(params, x, scale):
    b, c, h, w = x.shape
    Hs, Ws = int(round(h * scale)), int(round(w * scale))
    N = Hs * Ws
    pt = prep_kernel_params(params)

    # Per-location coordinate features, (4, C, N): depth slices are
    # [channel_mean, 1/scale, coor_h, coor_w]  (channel mean scales the ones plane).
    mean_vec = jnp.mean(x, axis=(0, 2, 3)).astype(jnp.float32)       # (C,)
    coor_h, coor_w = build_coord_vectors(h, w, scale)
    ch_plane = jnp.broadcast_to(coor_h[:, None], (Hs, Ws)).reshape(N)
    cw_plane = jnp.broadcast_to(coor_w[None, :], (Hs, Ws)).reshape(N)
    x_loc = jnp.stack([
        jnp.broadcast_to(mean_vec[:, None], (c, N)),
        jnp.full((c, N), 1.0 / scale, jnp.float32),
        jnp.broadcast_to(ch_plane[None, :], (c, N)),
        jnp.broadcast_to(cw_plane[None, :], (c, N)),
    ], axis=0)                                                       # (4, C, N)

    emb, routing = coord_mlp_pallas(x_loc, pt)        # (4, C, N), (E, N)

    # offset head input: (4, C*N) with columns ordered (channel, pixel)
    off = offset_head_pallas(emb.reshape(4, c * N), pt)              # (2, C*N)
    off_x = off[0].reshape(c, Hs, Ws)
    off_y = off[1].reshape(c, Hs, Ws)

    fea0 = grid_sample_zeros_per_channel(x, off_x, off_y, scale)     # (b, C, Hs, Ws)

    out_cn = expert_pallas(fea0.reshape(b, c, N), routing,
                           pt["wc_all"], pt["we_all"])               # (b, C, N)
    return out_cn.reshape(b, c, Hs, Ws)


# ---------------------------------------------------------------------------
# Pure-JAX reference (mirrors the PyTorch forward) for a silent self-check
# ---------------------------------------------------------------------------
def reference_forward(params, x, scale):
    b, c, h, w = x.shape
    Hs, Ws = int(round(h * scale)), int(round(w * scale))
    N = Hs * Ws
    E = params["wc"].shape[0]
    relu = lambda v: jnp.maximum(v, 0.0)
    sig = lambda v: 1.0 / (1.0 + jnp.exp(-v))

    mean_vec = jnp.mean(x, axis=(0, 2, 3))
    coor_h, coor_w = build_coord_vectors(h, w, scale)
    f0 = jnp.broadcast_to(mean_vec[None, None, :], (Hs, Ws, c))
    f1 = jnp.full((Hs, Ws, c), 1.0 / scale, jnp.float32)
    f2 = jnp.broadcast_to(coor_h[:, None, None], (Hs, Ws, c))
    f3 = jnp.broadcast_to(coor_w[None, :, None], (Hs, Ws, c))
    X = jnp.stack([f0, f1, f2, f3], axis=0)                      # (4, Hs, Ws, c)

    h1 = relu(X @ params["w_b1"] + params["b_b1"])
    emb = relu(h1 @ params["w_b2"] + params["b_b2"])              # (4, Hs, Ws, c)

    r1h = relu(emb @ params["w_r1a"] + params["b_r1a"])
    r1 = sig(r1h @ params["w_r1b"] + params["b_r1b"])             # (4, Hs, Ws, 1)
    r2in = jnp.transpose(r1[..., 0], (1, 2, 0))                   # (Hs, Ws, 4)
    g1 = relu(r2in @ params["w_r2a"] + params["b_r2a"])
    g2 = relu(g1 @ params["w_r2b"] + params["b_r2b"])
    routing = sig(g2 @ params["w_r2c"] + params["b_r2c"])         # (Hs, Ws, E)

    oin = jnp.transpose(emb, (3, 1, 2, 0))                        # (c, Hs, Ws, 4)
    o1 = relu(oin @ params["w_oa"] + params["b_oa"])
    o2 = relu(o1 @ params["w_ob"] + params["b_ob"])
    off = o2 @ params["w_oc"] + params["b_oc"]                    # (c, Hs, Ws, 2)

    fea0 = grid_sample_zeros_per_channel(x, off[..., 0], off[..., 1], scale)

    r_ne = routing.reshape(N, E)
    Wc = jnp.einsum("ne,ejc->njc", r_ne, params["wc"])
    We = jnp.einsum("ne,ecj->ncj", r_ne, params["we"])
    fea = fea0.transpose(0, 2, 3, 1).reshape(b, N, c)
    mid = jnp.einsum("njc,bnc->bnj", Wc, fea)
    outp = jnp.einsum("ncj,bnj->bnc", We, mid)
    out = outp.reshape(b, Hs, Ws, c).transpose(0, 3, 1, 2) + fea0
    return out


def init_params(key, C, E):
    ks = jax.random.split(key, 22)
    r = lambda k, s, sc: jax.random.normal(k, s, dtype=jnp.float32) * sc
    c8 = C // 8
    return {
        "w_b1": r(ks[0], (C, C), 0.25), "b_b1": r(ks[1], (C,), 0.1),
        "w_b2": r(ks[2], (C, C), 0.25), "b_b2": r(ks[3], (C,), 0.1),
        "w_r1a": r(ks[4], (C, 64), 0.2), "b_r1a": r(ks[5], (64,), 0.1),
        "w_r1b": r(ks[6], (64, 1), 0.2), "b_r1b": r(ks[7], (1,), 0.1),
        "w_r2a": r(ks[8], (4, 64), 0.3), "b_r2a": r(ks[9], (64,), 0.1),
        "w_r2b": r(ks[10], (64, 64), 0.15), "b_r2b": r(ks[11], (64,), 0.1),
        "w_r2c": r(ks[12], (64, E), 0.2), "b_r2c": r(ks[13], (E,), 0.1),
        "w_oa": r(ks[14], (4, 64), 0.3), "b_oa": r(ks[15], (64,), 0.1),
        "w_ob": r(ks[16], (64, 64), 0.15), "b_ob": r(ks[17], (64,), 0.1),
        "w_oc": r(ks[18], (64, 2), 0.2), "b_oc": r(ks[19], (2,), 0.05),
        "wc": r(ks[20], (E, c8, C), 0.15),     # weight_compress (E, C//8, C)
        "we": r(ks[21], (E, C, c8), 0.15),     # weight_expand   (E, C, C//8)
    }


if __name__ == "__main__":
    key = jax.random.PRNGKey(0)
    pkey, xkey = jax.random.split(key)
    B, C, H, W = 2, 32, 8, 8
    NUM_EXPERTS = 4
    SCALE = 2.0

    params = init_params(pkey, C, NUM_EXPERTS)
    x = jax.random.normal(xkey, (B, C, H, W), dtype=jnp.float32)

    out = band_attn_meta_upsample_forward(params, x, SCALE)
    out = jax.block_until_ready(out)

    Hs, Ws = int(round(H * SCALE)), int(round(W * SCALE))
    assert out.shape == (B, C, Hs, Ws), out.shape

    with jax.default_matmul_precision("float32"):
        ref = jax.block_until_ready(reference_forward(params, x, SCALE))
    if not bool(jnp.allclose(out, ref, rtol=3e-2, atol=3e-2)):
        err = float(jnp.max(jnp.abs(out - ref)))
        raise SystemExit(f"Pallas result does not match reference (max err {err})")

    print("KERNEL_OK")
</pallas_src>

<mosaic_0001>
module attributes {stable_mosaic.version = 11 : i64} {
  func.func @coord_mlp_kernel(%arg0: i32, %arg1: memref<4x32x256xf32, #tpu.memory_space<vmem>>, %arg2: memref<32x32xf32, #tpu.memory_space<vmem>>, %arg3: memref<32x1xf32, #tpu.memory_space<vmem>>, %arg4: memref<32x32xf32, #tpu.memory_space<vmem>>, %arg5: memref<32x1xf32, #tpu.memory_space<vmem>>, %arg6: memref<64x32xf32, #tpu.memory_space<vmem>>, %arg7: memref<64x1xf32, #tpu.memory_space<vmem>>, %arg8: memref<1x64xf32, #tpu.memory_space<vmem>>, %arg9: memref<1x1xf32, #tpu.memory_space<vmem>>, %arg10: memref<64x4xf32, #tpu.memory_space<vmem>>, %arg11: memref<64x1xf32, #tpu.memory_space<vmem>>, %arg12: memref<64x64xf32, #tpu.memory_space<vmem>>, %arg13: memref<64x1xf32, #tpu.memory_space<vmem>>, %arg14: memref<4x64xf32, #tpu.memory_space<vmem>>, %arg15: memref<4x1xf32, #tpu.memory_space<vmem>>, %arg16: memref<4x32x256xf32, #tpu.memory_space<vmem>>, %arg17: memref<4x256xf32, #tpu.memory_space<vmem>>) attributes {dimension_semantics = [#tpu.dimension_semantics<arbitrary>], iteration_bounds = array<i64: 1>, scalar_prefetch = 0 : i64, scratch_operands = 0 : i64, tpu.core_type = #tpu.core_type<tc>, window_params = [{pipeline_mode = #tpu.pipeline_mode<synchronous>, transform_indices = @transform_0, window_bounds = array<i64: 4, 32, 256>}, {pipeline_mode = #tpu.pipeline_mode<synchronous>, transform_indices = @transform_1, window_bounds = array<i64: 32, 32>}, {pipeline_mode = #tpu.pipeline_mode<synchronous>, transform_indices = @transform_2, window_bounds = array<i64: 32, 1>}, {pipeline_mode = #tpu.pipeline_mode<synchronous>, transform_indices = @transform_3, window_bounds = array<i64: 32, 32>}, {pipeline_mode = #tpu.pipeline_mode<synchronous>, transform_indices = @transform_4, window_bounds = array<i64: 32, 1>}, {pipeline_mode = #tpu.pipeline_mode<synchronous>, transform_indices = @transform_5, window_bounds = array<i64: 64, 32>}, {pipeline_mode = #tpu.pipeline_mode<synchronous>, transform_indices = @transform_6, window_bounds = array<i64: 64, 1>}, {pipeline_mode = #tpu.pipeline_mode<synchronous>, transform_indices = @transform_7, window_bounds = array<i64: 1, 64>}, {pipeline_mode = #tpu.pipeline_mode<synchronous>, transform_indices = @transform_8, window_bounds = array<i64: 1, 1>}, {pipeline_mode = #tpu.pipeline_mode<synchronous>, transform_indices = @transform_9, window_bounds = array<i64: 64, 4>}, {pipeline_mode = #tpu.pipeline_mode<synchronous>, transform_indices = @transform_10, window_bounds = array<i64: 64, 1>}, {pipeline_mode = #tpu.pipeline_mode<synchronous>, transform_indices = @transform_11, window_bounds = array<i64: 64, 64>}, {pipeline_mode = #tpu.pipeline_mode<synchronous>, transform_indices = @transform_12, window_bounds = array<i64: 64, 1>}, {pipeline_mode = #tpu.pipeline_mode<synchronous>, transform_indices = @transform_13, window_bounds = array<i64: 4, 64>}, {pipeline_mode = #tpu.pipeline_mode<synchronous>, transform_indices = @transform_14, window_bounds = array<i64: 4, 1>}, {pipeline_mode = #tpu.pipeline_mode<synchronous>, transform_indices = @transform_15, window_bounds = array<i64: 4, 32, 256>}, {pipeline_mode = #tpu.pipeline_mode<synchronous>, transform_indices = @transform_16, window_bounds = array<i64: 4, 256>}]} {
    %c0 = arith.constant 0 : index
    %c0_0 = arith.constant 0 : index
    %0 = vector.load %arg2[%c0, %c0_0] : memref<32x32xf32, #tpu.memory_space<vmem>>, vector<32x32xf32>
    %c0_1 = arith.constant 0 : index
    %c0_2 = arith.constant 0 : index
    %1 = vector.load %arg3[%c0_1, %c0_2] : memref<32x1xf32, #tpu.memory_space<vmem>>, vector<32x1xf32>
    %c0_3 = arith.constant 0 : index
    %c0_4 = arith.constant 0 : index
    %2 = vector.load %arg4[%c0_3, %c0_4] : memref<32x32xf32, #tpu.memory_space<vmem>>, vector<32x32xf32>
    %c0_5 = arith.constant 0 : index
    %c0_6 = arith.constant 0 : index
    %3 = vector.load %arg5[%c0_5, %c0_6] : memref<32x1xf32, #tpu.memory_space<vmem>>, vector<32x1xf32>
    %c0_7 = arith.constant 0 : index
    %c0_8 = arith.constant 0 : index
    %4 = vector.load %arg6[%c0_7, %c0_8] : memref<64x32xf32, #tpu.memory_space<vmem>>, vector<64x32xf32>
    %c0_9 = arith.constant 0 : index
    %c0_10 = arith.constant 0 : index
    %5 = vector.load %arg7[%c0_9, %c0_10] : memref<64x1xf32, #tpu.memory_space<vmem>>, vector<64x1xf32>
    %c0_11 = arith.constant 0 : index
    %c0_12 = arith.constant 0 : index
    %6 = vector.load %arg8[%c0_11, %c0_12] : memref<1x64xf32, #tpu.memory_space<vmem>>, vector<1x64xf32>
    %c0_13 = arith.constant 0 : index
    %c0_14 = arith.constant 0 : index
    %7 = vector.load %arg9[%c0_13, %c0_14] : memref<1x1xf32, #tpu.memory_space<vmem>>, vector<1x1xf32>
    %c0_15 = arith.constant 0 : index
    %c0_16 = arith.constant 0 : index
    %c0_17 = arith.constant 0 : index
    %8 = vector.load %arg1[%c0_15, %c0_16, %c0_17] : memref<4x32x256xf32, #tpu.memory_space<vmem>>, vector<1x32x256xf32>
    %9 = vector.shape_cast %8 : vector<1x32x256xf32> to vector<32x256xf32>
    %cst = arith.constant dense<0.000000e+00> : vector<32x256xf32>
    %10 = tpu.matmul %0, %9, %cst {dimension_numbers = #tpu.dot_dimension_numbers<[1], [0], [0], [1], [0, 0, 1, 1], [], []>} : vector<32x32xf32>, vector<32x256xf32>, vector<32x256xf32> -> vector<32x256xf32>
    %11 = vector.broadcast %1 : vector<32x1xf32> to vector<32x256xf32>
    %12 = arith.addf %10, %11 : vector<32x256xf32>
    %cst_18 = arith.constant 0.000000e+00 : f32
    %13 = vector.broadcast %cst_18 : f32 to vector<32x256xf32>
    %14 = arith.maximumf %12, %13 : vector<32x256xf32>
    %cst_19 = arith.constant dense<0.000000e+00> : vector<32x256xf32>
    %15 = tpu.matmul %2, %14, %cst_19 {dimension_numbers = #tpu.dot_dimension_numbers<[1], [0], [0], [1], [0, 0, 1, 1], [], []>} : vector<32x32xf32>, vector<32x256xf32>, vector<32x256xf32> -> vector<32x256xf32>
    %16 = vector.broadcast %3 : vector<32x1xf32> to vector<32x256xf32>
    %17 = arith.addf %15, %16 : vector<32x256xf32>
    %cst_20 = arith.constant 0.000000e+00 : f32
    %18 = vector.broadcast %cst_20 : f32 to vector<32x256xf32>
    %19 = arith.maximumf %17, %18 : vector<32x256xf32>
    %c0_21 = arith.constant 0 : index
    %c0_22 = arith.constant 0 : index
    %c0_23 = arith.constant 0 : index
    %20 = vector.load %arg16[%c0_21, %c0_22, %c0_23] : memref<4x32x256xf32, #tpu.memory_space<vmem>>, vector<1x32x256xf32>
    %21 = vector.shape_cast %20 : vector<1x32x256xf32> to vector<32x256xf32>
    %22 = vector.shape_cast %19 : vector<32x256xf32> to vector<1x32x256xf32>
    tpu.vector_store %arg16[%c0_21, %c0_22, %c0_23], %22 {strides = array<i32>} : memref<4x32x256xf32, #tpu.memory_space<vmem>>, vector<1x32x256xf32>,
    %cst_24 = arith.constant dense<0.000000e+00> : vector<64x256xf32>
    %23 = tpu.matmul %4, %19, %cst_24 {dimension_numbers = #tpu.dot_dimension_numbers<[1], [0], [0], [1], [0, 0, 1, 1], [], []>} : vector<64x32xf32>, vector<32x256xf32>, vector<64x256xf32> -> vector<64x256xf32>
    %24 = vector.broadcast %5 : vector<64x1xf32> to vector<64x256xf32>
    %25 = arith.addf %23, %24 : vector<64x256xf32>
    %cst_25 = arith.constant 0.000000e+00 : f32
    %26 = vector.broadcast %cst_25 : f32 to vector<64x256xf32>
    %27 = arith.maximumf %25, %26 : vector<64x256xf32>
    %cst_26 = arith.constant dense<0.000000e+00> : vector<1x256xf32>
    %28 = tpu.matmul %6, %27, %cst_26 {dimension_numbers = #tpu.dot_dimension_numbers<[1], [0], [0], [1], [0, 0, 1, 1], [], []>} : vector<1x64xf32>, vector<64x256xf32>, vector<1x256xf32> -> vector<1x256xf32>
    %29 = vector.broadcast %7 : vector<1x1xf32> to vector<1x256xf32>
    %30 = arith.addf %28, %29 : vector<1x256xf32>
    %cst_27 = arith.constant 0.000000e+00 : f32
    %31 = vector.broadcast %cst_27 : f32 to vector<1x256xf32>
    %32 = arith.subf %31, %30 : vector<1x256xf32>
    %33 = math.exp %32 : vector<1x256xf32>
    %cst_28 = arith.constant 1.000000e+00 : f32
    %34 = vector.broadcast %cst_28 : f32 to vector<1x256xf32>
    %35 = arith.addf %34, %33 : vector<1x256xf32>
    %cst_29 = arith.constant 1.000000e+00 : f32
    %36 = vector.broadcast %cst_29 : f32 to vector<1x256xf32>
    %37 = arith.divf %36, %35 : vector<1x256xf32>
    %c1 = arith.constant 1 : index
    %c0_30 = arith.constant 0 : index
    %c0_31 = arith.constant 0 : index
    %38 = vector.load %arg1[%c1, %c0_30, %c0_31] : memref<4x32x256xf32, #tpu.memory_space<vmem>>, vector<1x32x256xf32>
    %39 = vector.shape_cast %38 : vector<1x32x256xf32> to vector<32x256xf32>
    %cst_32 = arith.constant dense<0.000000e+00> : vector<32x256xf32>
    %40 = tpu.matmul %0, %39, %cst_32 {dimension_numbers = #tpu.dot_dimension_numbers<[1], [0], [0], [1], [0, 0, 1, 1], [], []>} : vector<32x32xf32>, vector<32x256xf32>, vector<32x256xf32> -> vector<32x256xf32>
    %41 = vector.broadcast %1 : vector<32x1xf32> to vector<32x256xf32>
    %42 = arith.addf %40, %41 : vector<32x256xf32>
    %cst_33 = arith.constant 0.000000e+00 : f32
    %43 = vector.broadcast %cst_33 : f32 to vector<32x256xf32>
    %44 = arith.maximumf %42, %43 : vector<32x256xf32>
    %cst_34 = arith.constant dense<0.000000e+00> : vector<32x256xf32>
    %45 = tpu.matmul %2, %44, %cst_34 {dimension_numbers = #tpu.dot_dimension_numbers<[1], [0], [0], [1], [0, 0, 1, 1], [], []>} : vector<32x32xf32>, vector<32x256xf32>, vector<32x256xf32> -> vector<32x256xf32>
    %46 = vector.broadcast %3 : vector<32x1xf32> to vector<32x256xf32>
    %47 = arith.addf %45, %46 : vector<32x256xf32>
    %cst_35 = arith.constant 0.000000e+00 : f32
    %48 = vector.broadcast %cst_35 : f32 to vector<32x256xf32>
    %49 = arith.maximumf %47, %48 : vector<32x256xf32>
    %c1_36 = arith.constant 1 : index
    %c0_37 = arith.constant 0 : index
    %c0_38 = arith.constant 0 : index
    %50 = vector.load %arg16[%c1_36, %c0_37, %c0_38] : memref<4x32x256xf32, #tpu.memory_space<vmem>>, vector<1x32x256xf32>
    %51 = vector.shape_cast %50 : vector<1x32x256xf32> to vector<32x256xf32>
    %52 = vector.shape_cast %49 : vector<32x256xf32> to vector<1x32x256xf32>
    tpu.vector_store %arg16[%c1_36, %c0_37, %c0_38], %52 {strides = array<i32>} : memref<4x32x256xf32, #tpu.memory_space<vmem>>, vector<1x32x256xf32>,
    %cst_39 = arith.constant dense<0.000000e+00> : vector<64x256xf32>
    %53 = tpu.matmul %4, %49, %cst_39 {dimension_numbers = #tpu.dot_dimension_numbers<[1], [0], [0], [1], [0, 0, 1, 1], [], []>} : vector<64x32xf32>, vector<32x256xf32>, vector<64x256xf32> -> vector<64x256xf32>
    %54 = vector.broadcast %5 : vector<64x1xf32> to vector<64x256xf32>
    %55 = arith.addf %53, %54 : vector<64x256xf32>
    %cst_40 = arith.constant 0.000000e+00 : f32
    %56 = vector.broadcast %cst_40 : f32 to vector<64x256xf32>
    %57 = arith.maximumf %55, %56 : vector<64x256xf32>
    %cst_41 = arith.constant dense<0.000000e+00> : vector<1x256xf32>
    %58 = tpu.matmul %6, %57, %cst_41 {dimension_numbers = #tpu.dot_dimension_numbers<[1], [0], [0], [1], [0, 0, 1, 1], [], []>} : vector<1x64xf32>, vector<64x256xf32>, vector<1x256xf32> -> vector<1x256xf32>
    %59 = vector.broadcast %7 : vector<1x1xf32> to vector<1x256xf32>
    %60 = arith.addf %58, %59 : vector<1x256xf32>
    %cst_42 = arith.constant 0.000000e+00 : f32
    %61 = vector.broadcast %cst_42 : f32 to vector<1x256xf32>
    %62 = arith.subf %61, %60 : vector<1x256xf32>
    %63 = math.exp %62 : vector<1x256xf32>
    %cst_43 = arith.constant 1.000000e+00 : f32
    %64 = vector.broadcast %cst_43 : f32 to vector<1x256xf32>
    %65 = arith.addf %64, %63 : vector<1x256xf32>
    %cst_44 = arith.constant 1.000000e+00 : f32
    %66 = vector.broadcast %cst_44 : f32 to vector<1x256xf32>
    %67 = arith.divf %66, %65 : vector<1x256xf32>
    %c2 = arith.constant 2 : index
    %c0_45 = arith.constant 0 : index
    %c0_46 = arith.constant 0 : index
    %68 = vector.load %arg1[%c2, %c0_45, %c0_46] : memref<4x32x256xf32, #tpu.memory_space<vmem>>, vector<1x32x256xf32>
    %69 = vector.shape_cast %68 : vector<1x32x256xf32> to vector<32x256xf32>
    %cst_47 = arith.constant dense<0.000000e+00> : vector<32x256xf32>
    %70 = tpu.matmul %0, %69, %cst_47 {dimension_numbers = #tpu.dot_dimension_numbers<[1], [0], [0], [1], [0, 0, 1, 1], [], []>} : vector<32x32xf32>, vector<32x256xf32>, vector<32x256xf32> -> vector<32x256xf32>
    %71 = vector.broadcast %1 : vector<32x1xf32> to vector<32x256xf32>
    %72 = arith.addf %70, %71 : vector<32x256xf32>
    %cst_48 = arith.constant 0.000000e+00 : f32
    %73 = vector.broadcast %cst_48 : f32 to vector<32x256xf32>
    %74 = arith.maximumf %72, %73 : vector<32x256xf32>
    %cst_49 = arith.constant dense<0.000000e+00> : vector<32x256xf32>
    %75 = tpu.matmul %2, %74, %cst_49 {dimension_numbers = #tpu.dot_dimension_numbers<[1], [0], [0], [1], [0, 0, 1, 1], [], []>} : vector<32x32xf32>, vector<32x256xf32>, vector<32x256xf32> -> vector<32x256xf32>
    %76 = vector.broadcast %3 : vector<32x1xf32> to vector<32x256xf32>
    %77 = arith.addf %75, %76 : vector<32x256xf32>
    %cst_50 = arith.constant 0.000000e+00 : f32
    %78 = vector.broadcast %cst_50 : f32 to vector<32x256xf32>
    %79 = arith.maximumf %77, %78 : vector<32x256xf32>
    %c2_51 = arith.constant 2 : index
    %c0_52 = arith.constant 0 : index
    %c0_53 = arith.constant 0 : index
    %80 = vector.load %arg16[%c2_51, %c0_52, %c0_53] : memref<4x32x256xf32, #tpu.memory_space<vmem>>, vector<1x32x256xf32>
    %81 = vector.shape_cast %80 : vector<1x32x256xf32> to vector<32x256xf32>
    %82 = vector.shape_cast %79 : vector<32x256xf32> to vector<1x32x256xf32>
    tpu.vector_store %arg16[%c2_51, %c0_52, %c0_53], %82 {strides = array<i32>} : memref<4x32x256xf32, #tpu.memory_space<vmem>>, vector<1x32x256xf32>,
    %cst_54 = arith.constant dense<0.000000e+00> : vector<64x256xf32>
    %83 = tpu.matmul %4, %79, %cst_54 {dimension_numbers = #tpu.dot_dimension_numbers<[1], [0], [0], [1], [0, 0, 1, 1], [], []>} : vector<64x32xf32>, vector<32x256xf32>, vector<64x256xf32> -> vector<64x256xf32>
    %84 = vector.broadcast %5 : vector<64x1xf32> to vector<64x256xf32>
    %85 = arith.addf %83, %84 : vector<64x256xf32>
    %cst_55 = arith.constant 0.000000e+00 : f32
    %86 = vector.broadcast %cst_55 : f32 to vector<64x256xf32>
    %87 = arith.maximumf %85, %86 : vector<64x256xf32>
    %cst_56 = arith.constant dense<0.000000e+00> : vector<1x256xf32>
    %88 = tpu.matmul %6, %87, %cst_56 {dimension_numbers = #tpu.dot_dimension_numbers<[1], [0], [0], [1], [0, 0, 1, 1], [], []>} : vector<1x64xf32>, vector<64x256xf32>, vector<1x256xf32> -> vector<1x256xf32>
    %89 = vector.broadcast %7 : vector<1x1xf32> to vector<1x256xf32>
    %90 = arith.addf %88, %89 : vector<1x256xf32>
    %cst_57 = arith.constant 0.000000e+00 : f32
    %91 = vector.broadcast %cst_57 : f32 to vector<1x256xf32>
    %92 = arith.subf %91, %90 : vector<1x256xf32>
    %93 = math.exp %92 : vector<1x256xf32>
    %cst_58 = arith.constant 1.000000e+00 : f32
    %94 = vector.broadcast %cst_58 : f32 to vector<1x256xf32>
    %95 = arith.addf %94, %93 : vector<1x256xf32>
    %cst_59 = arith.constant 1.000000e+00 : f32
    %96 = vector.broadcast %cst_59 : f32 to vector<1x256xf32>
    %97 = arith.divf %96, %95 : vector<1x256xf32>
    %c3 = arith.constant 3 : index
    %c0_60 = arith.constant 0 : index
    %c0_61 = arith.constant 0 : index
    %98 = vector.load %arg1[%c3, %c0_60, %c0_61] : memref<4x32x256xf32, #tpu.memory_space<vmem>>, vector<1x32x256xf32>
    %99 = vector.shape_cast %98 : vector<1x32x256xf32> to vector<32x256xf32>
    %cst_62 = arith.constant dense<0.000000e+00> : vector<32x256xf32>
    %100 = tpu.matmul %0, %99, %cst_62 {dimension_numbers = #tpu.dot_dimension_numbers<[1], [0], [0], [1], [0, 0, 1, 1], [], []>} : vector<32x32xf32>, vector<32x256xf32>, vector<32x256xf32> -> vector<32x256xf32>
    %101 = vector.broadcast %1 : vector<32x1xf32> to vector<32x256xf32>
    %102 = arith.addf %100, %101 : vector<32x256xf32>
    %cst_63 = arith.constant 0.000000e+00 : f32
    %103 = vector.broadcast %cst_63 : f32 to vector<32x256xf32>
    %104 = arith.maximumf %102, %103 : vector<32x256xf32>
    %cst_64 = arith.constant dense<0.000000e+00> : vector<32x256xf32>
    %105 = tpu.matmul %2, %104, %cst_64 {dimension_numbers = #tpu.dot_dimension_numbers<[1], [0], [0], [1], [0, 0, 1, 1], [], []>} : vector<32x32xf32>, vector<32x256xf32>, vector<32x256xf32> -> vector<32x256xf32>
    %106 = vector.broadcast %3 : vector<32x1xf32> to vector<32x256xf32>
    %107 = arith.addf %105, %106 : vector<32x256xf32>
    %cst_65 = arith.constant 0.000000e+00 : f32
    %108 = vector.broadcast %cst_65 : f32 to vector<32x256xf32>
    %109 = arith.maximumf %107, %108 : vector<32x256xf32>
    %c3_66 = arith.constant 3 : index
    %c0_67 = arith.constant 0 : index
    %c0_68 = arith.constant 0 : index
    %110 = vector.load %arg16[%c3_66, %c0_67, %c0_68] : memref<4x32x256xf32, #tpu.memory_space<vmem>>, vector<1x32x256xf32>
    %111 = vector.shape_cast %110 : vector<1x32x256xf32> to vector<32x256xf32>
    %112 = vector.shape_cast %109 : vector<32x256xf32> to vector<1x32x256xf32>
    tpu.vector_store %arg16[%c3_66, %c0_67, %c0_68], %112 {strides = array<i32>} : memref<4x32x256xf32, #tpu.memory_space<vmem>>, vector<1x32x256xf32>,
    %cst_69 = arith.constant dense<0.000000e+00> : vector<64x256xf32>
    %113 = tpu.matmul %4, %109, %cst_69 {dimension_numbers = #tpu.dot_dimension_numbers<[1], [0], [0], [1], [0, 0, 1, 1], [], []>} : vector<64x32xf32>, vector<32x256xf32>, vector<64x256xf32> -> vector<64x256xf32>
    %114 = vector.broadcast %5 : vector<64x1xf32> to vector<64x256xf32>
    %115 = arith.addf %113, %114 : vector<64x256xf32>
    %cst_70 = arith.constant 0.000000e+00 : f32
    %116 = vector.broadcast %cst_70 : f32 to vector<64x256xf32>
    %117 = arith.maximumf %115, %116 : vector<64x256xf32>
    %cst_71 = arith.constant dense<0.000000e+00> : vector<1x256xf32>
    %118 = tpu.matmul %6, %117, %cst_71 {dimension_numbers = #tpu.dot_dimension_numbers<[1], [0], [0], [1], [0, 0, 1, 1], [], []>} : vector<1x64xf32>, vector<64x256xf32>, vector<1x256xf32> -> vector<1x256xf32>
    %119 = vector.broadcast %7 : vector<1x1xf32> to vector<1x256xf32>
    %120 = arith.addf %118, %119 : vector<1x256xf32>
    %cst_72 = arith.constant 0.000000e+00 : f32
    %121 = vector.broadcast %cst_72 : f32 to vector<1x256xf32>
    %122 = arith.subf %121, %120 : vector<1x256xf32>
    %123 = math.exp %122 : vector<1x256xf32>
    %cst_73 = arith.constant 1.000000e+00 : f32
    %124 = vector.broadcast %cst_73 : f32 to vector<1x256xf32>
    %125 = arith.addf %124, %123 : vector<1x256xf32>
    %cst_74 = arith.constant 1.000000e+00 : f32
    %126 = vector.broadcast %cst_74 : f32 to vector<1x256xf32>
    %127 = arith.divf %126, %125 : vector<1x256xf32>
    %128 = tpu.concatenate %37, %67, %97, %127 in 0 : vector<1x256xf32>, vector<1x256xf32>, vector<1x256xf32>, vector<1x256xf32> -> vector<4x256xf32>
    %c0_75 = arith.constant 0 : index
    %c0_76 = arith.constant 0 : index
    %129 = vector.load %arg10[%c0_75, %c0_76] : memref<64x4xf32, #tpu.memory_space<vmem>>, vector<64x4xf32>
    %cst_77 = arith.constant dense<0.000000e+00> : vector<64x256xf32>
    %130 = tpu.matmul %129, %128, %cst_77 {dimension_numbers = #tpu.dot_dimension_numbers<[1], [0], [0], [1], [0, 0, 1, 1], [], []>} : vector<64x4xf32>, vector<4x256xf32>, vector<64x256xf32> -> vector<64x256xf32>
    %c0_78 = arith.constant 0 : index
    %c0_79 = arith.constant 0 : index
    %131 = vector.load %arg11[%c0_78, %c0_79] : memref<64x1xf32, #tpu.memory_space<vmem>>, vector<64x1xf32>
    %132 = vector.broadcast %131 : vector<64x1xf32> to vector<64x256xf32>
    %133 = arith.addf %130, %132 : vector<64x256xf32>
    %cst_80 = arith.constant 0.000000e+00 : f32
    %134 = vector.broadcast %cst_80 : f32 to vector<64x256xf32>
    %135 = arith.maximumf %133, %134 : vector<64x256xf32>
    %c0_81 = arith.constant 0 : index
    %c0_82 = arith.constant 0 : index
    %136 = vector.load %arg12[%c0_81, %c0_82] : memref<64x64xf32, #tpu.memory_space<vmem>>, vector<64x64xf32>
    %cst_83 = arith.constant dense<0.000000e+00> : vector<64x256xf32>
    %137 = tpu.matmul %136, %135, %cst_83 {dimension_numbers = #tpu.dot_dimension_numbers<[1], [0], [0], [1], [0, 0, 1, 1], [], []>} : vector<64x64xf32>, vector<64x256xf32>, vector<64x256xf32> -> vector<64x256xf32>
    %c0_84 = arith.constant 0 : index
    %c0_85 = arith.constant 0 : index
    %138 = vector.load %arg13[%c0_84, %c0_85] : memref<64x1xf32, #tpu.memory_space<vmem>>, vector<64x1xf32>
    %139 = vector.broadcast %138 : vector<64x1xf32> to vector<64x256xf32>
    %140 = arith.addf %137, %139 : vector<64x256xf32>
    %cst_86 = arith.constant 0.000000e+00 : f32
    %141 = vector.broadcast %cst_86 : f32 to vector<64x256xf32>
    %142 = arith.maximumf %140, %141 : vector<64x256xf32>
    %c0_87 = arith.constant 0 : index
    %c0_88 = arith.constant 0 : index
    %143 = vector.load %arg14[%c0_87, %c0_88] : memref<4x64xf32, #tpu.memory_space<vmem>>, vector<4x64xf32>
    %cst_89 = arith.constant dense<0.000000e+00> : vector<4x256xf32>
    %144 = tpu.matmul %143, %142, %cst_89 {dimension_numbers = #tpu.dot_dimension_numbers<[1], [0], [0], [1], [0, 0, 1, 1], [], []>} : vector<4x64xf32>, vector<64x256xf32>, vector<4x256xf32> -> vector<4x256xf32>
    %c0_90 = arith.constant 0 : index
    %c0_91 = arith.constant 0 : index
    %145 = vector.load %arg15[%c0_90, %c0_91] : memref<4x1xf32, #tpu.memory_space<vmem>>, vector<4x1xf32>
    %146 = vector.broadcast %145 : vector<4x1xf32> to vector<4x256xf32>
    %147 = arith.addf %144, %146 : vector<4x256xf32>
    %cst_92 = arith.constant 0.000000e+00 : f32
    %148 = vector.broadcast %cst_92 : f32 to vector<4x256xf32>
    %149 = arith.subf %148, %147 : vector<4x256xf32>
    %150 = math.exp %149 : vector<4x256xf32>
    %cst_93 = arith.constant 1.000000e+00 : f32
    %151 = vector.broadcast %cst_93 : f32 to vector<4x256xf32>
    %152 = arith.addf %151, %150 : vector<4x256xf32>
    %cst_94 = arith.constant 1.000000e+00 : f32
    %153 = vector.broadcast %cst_94 : f32 to vector<4x256xf32>
    %154 = arith.divf %153, %152 : vector<4x256xf32>
    %c0_95 = arith.constant 0 : index
    %c0_96 = arith.constant 0 : index
    %155 = vector.load %arg17[%c0_95, %c0_96] : memref<4x256xf32, #tpu.memory_space<vmem>>, vector<4x256xf32>
    tpu.vector_store %arg17[%c0_95, %c0_96], %154 {strides = array<i32>} : memref<4x256xf32, #tpu.memory_space<vmem>>, vector<4x256xf32>,
    return
  }
  func.func @transform_0(%arg0: i32) -> (i32, i32, i32) {
    %c0_i32 = arith.constant 0 : i32
    %c0_i32_0 = arith.constant 0 : i32
    %c0_i32_1 = arith.constant 0 : i32
    %c0_i32_2 = arith.constant 0 : i32
    return %c0_i32, %c0_i32_0, %c0_i32_1 : i32, i32, i32
  }
  func.func @transform_1(%arg0: i32) -> (i32, i32) {
    %c0_i32 = arith.constant 0 : i32
    %c0_i32_0 = arith.constant 0 : i32
    %c0_i32_1 = arith.constant 0 : i32
    return %c0_i32, %c0_i32_0 : i32, i32
  }
  func.func @transform_2(%arg0: i32) -> (i32, i32) {
    %c0_i32 = arith.constant 0 : i32
    %c0_i32_0 = arith.constant 0 : i32
    %c0_i32_1 = arith.constant 0 : i32
    return %c0_i32, %c0_i32_0 : i32, i32
  }
  func.func @transform_3(%arg0: i32) -> (i32, i32) {
    %c0_i32 = arith.constant 0 : i32
    %c0_i32_0 = arith.constant 0 : i32
    %c0_i32_1 = arith.constant 0 : i32
    return %c0_i32, %c0_i32_0 : i32, i32
  }
  func.func @transform_4(%arg0: i32) -> (i32, i32) {
    %c0_i32 = arith.constant 0 : i32
    %c0_i32_0 = arith.constant 0 : i32
    %c0_i32_1 = arith.constant 0 : i32
    return %c0_i32, %c0_i32_0 : i32, i32
  }
  func.func @transform_5(%arg0: i32) -> (i32, i32) {
    %c0_i32 = arith.constant 0 : i32
    %c0_i32_0 = arith.constant 0 : i32
    %c0_i32_1 = arith.constant 0 : i32
    return %c0_i32, %c0_i32_0 : i32, i32
  }
  func.func @transform_6(%arg0: i32) -> (i32, i32) {
    %c0_i32 = arith.constant 0 : i32
    %c0_i32_0 = arith.constant 0 : i32
    %c0_i32_1 = arith.constant 0 : i32
    return %c0_i32, %c0_i32_0 : i32, i32
  }
  func.func @transform_7(%arg0: i32) -> (i32, i32) {
    %c0_i32 = arith.constant 0 : i32
    %c0_i32_0 = arith.constant 0 : i32
    %c0_i32_1 = arith.constant 0 : i32
    return %c0_i32, %c0_i32_0 : i32, i32
  }
  func.func @transform_8(%arg0: i32) -> (i32, i32) {
    %c0_i32 = arith.constant 0 : i32
    %c0_i32_0 = arith.constant 0 : i32
    %c0_i32_1 = arith.constant 0 : i32
    return %c0_i32, %c0_i32_0 : i32, i32
  }
  func.func @transform_9(%arg0: i32) -> (i32, i32) {
    %c0_i32 = arith.constant 0 : i32
    %c0_i32_0 = arith.constant 0 : i32
    %c0_i32_1 = arith.constant 0 : i32
    return %c0_i32, %c0_i32_0 : i32, i32
  }
  func.func @transform_10(%arg0: i32) -> (i32, i32) {
    %c0_i32 = arith.constant 0 : i32
    %c0_i32_0 = arith.constant 0 : i32
    %c0_i32_1 = arith.constant 0 : i32
    return %c0_i32, %c0_i32_0 : i32, i32
  }
  func.func @transform_11(%arg0: i32) -> (i32, i32) {
    %c0_i32 = arith.constant 0 : i32
    %c0_i32_0 = arith.constant 0 : i32
    %c0_i32_1 = arith.constant 0 : i32
    return %c0_i32, %c0_i32_0 : i32, i32
  }
  func.func @transform_12(%arg0: i32) -> (i32, i32) {
    %c0_i32 = arith.constant 0 : i32
    %c0_i32_0 = arith.constant 0 : i32
    %c0_i32_1 = arith.constant 0 : i32
    return %c0_i32, %c0_i32_0 : i32, i32
  }
  func.func @transform_13(%arg0: i32) -> (i32, i32) {
    %c0_i32 = arith.constant 0 : i32
    %c0_i32_0 = arith.constant 0 : i32
    %c0_i32_1 = arith.constant 0 : i32
    return %c0_i32, %c0_i32_0 : i32, i32
  }
  func.func @transform_14(%arg0: i32) -> (i32, i32) {
    %c0_i32 = arith.constant 0 : i32
    %c0_i32_0 = arith.constant 0 : i32
    %c0_i32_1 = arith.constant 0 : i32
    return %c0_i32, %c0_i32_0 : i32, i32
  }
  func.func @transform_15(%arg0: i32) -> (i32, i32, i32) {
    %c0_i32 = arith.constant 0 : i32
    %c0_i32_0 = arith.constant 0 : i32
    %c0_i32_1 = arith.constant 0 : i32
    %c0_i32_2 = arith.constant 0 : i32
    return %c0_i32, %c0_i32_0, %c0_i32_1 : i32, i32, i32
  }
  func.func @transform_16(%arg0: i32) -> (i32, i32) {
    %c0_i32 = arith.constant 0 : i32
    %c0_i32_0 = arith.constant 0 : i32
    %c0_i32_1 = arith.constant 0 : i32
    return %c0_i32, %c0_i32_0 : i32, i32
  }
}

</mosaic_0001>

<llo_original>
// kernel: tpu_custom_call.1
$region0: #{tpu_custom_call.1}
  #allocation0 [shape = 'u32[]', space=smem, size = 0x4, offset = 0x4, fixed_abs, tag = 'smem constant byte address 0x4 - core index']
  #allocation1 [shape = 'u32[144,128]{1,0:T(1,128)}', space=vmem, size = 0x12000, scoped, tag = 'internal scratch']
  #allocation2 [shape = 'f32[1,1]{1,0:T(1,128)S(1)}', space=vmem, size = 0x200, scoped, tag = 'scoped memory for tpu_custom_call.1']
  %s0 = inlined_call_operand.vmem [shape: f32[4,32,256], index: 0, kind: input, shape index: {}]
  %s1 = inlined_call_operand.vmem [shape: f32[32,32], index: 1, kind: input, shape index: {}]
  %s2 = inlined_call_operand.vmem [shape: f32[32,1], index: 2, kind: input, shape index: {}]
  %s3 = inlined_call_operand.vmem [shape: f32[32,32], index: 3, kind: input, shape index: {}]
  %s4 = inlined_call_operand.vmem [shape: f32[32,1], index: 4, kind: input, shape index: {}]
  %s5 = inlined_call_operand.vmem [shape: f32[64,32], index: 5, kind: input, shape index: {}]
  %s6 = inlined_call_operand.vmem [shape: f32[64,1], index: 6, kind: input, shape index: {}]
  %s7 = inlined_call_operand.vmem [shape: f32[1,64], index: 7, kind: input, shape index: {}]
  %s8 = inlined_call_operand.<no memory space> [shape: f32[1,1], index: 8, kind: input, shape index: {}]
  %s9 = inlined_call_operand.vmem [shape: f32[64,4], index: 9, kind: input, shape index: {}]
  %s10 = inlined_call_operand.vmem [shape: f32[64,1], index: 10, kind: input, shape index: {}]
  %s11 = inlined_call_operand.vmem [shape: f32[64,64], index: 11, kind: input, shape index: {}]
  %s12 = inlined_call_operand.vmem [shape: f32[64,1], index: 12, kind: input, shape index: {}]
  %s13 = inlined_call_operand.vmem [shape: f32[4,64], index: 13, kind: input, shape index: {}]
  %s14 = inlined_call_operand.vmem [shape: f32[4,1], index: 14, kind: input, shape index: {}]
  %s15 = inlined_call_operand.hbm [shape: f32[4,32,256], index: 15, kind: output, shape index: {0}]
  %s16 = inlined_call_operand.hbm [shape: f32[4,256], index: 16, kind: output, shape index: {1}]
  %17 = xla_tuple %s15, %s16
  %s18 = sld [smem:[#allocation0]]
  $region78: #{tpu_custom_call.1} parent=0
    _
  %s20 = ssub.s32 1, %s18
  %s21 = scalar_select 0, %s20, %s18
  %v22 = vstv %s8
  %23 = vst [vmem:[#allocation2] sm:$0x1] %v22
  $region1: #{tpu_custom_call.1} parent=0
    #allocation3 [shape = 'u8[131072]{0}', space=vmem, size = 0x20000, scoped, tag = 'output window, operand 0, single buffered']
    #allocation4 [shape = 's32[1]{0}', space=sflag, size = 0x4, scoped, tag = 'scoped memory for tpu_custom_call.1']
    #allocation5 [shape = 'u8[4096]{0}', space=vmem, size = 0x1000, scoped, tag = 'output window, operand 1, single buffered']
    #allocation6 [shape = 's32[1]{0}', space=sflag, size = 0x4, scoped, tag = 'scoped memory for tpu_custom_call.1']
    %24 = vsyncpa [#allocation4], 0
    %25 = vsyncpa [#allocation6], 0
    // Predicated region
    $region2: #{tpu_custom_call.1} parent=1 // pred_check
      _
    $region3: #{tpu_custom_call.1} parent=1 // pred_check_branch
      %27 = sbr.rel (0) target = $region5
    $region4: #{tpu_custom_call.1} parent=1 // pred_region
      _
    $region5: #{tpu_custom_call.1} parent=1 // pred_fallthru
      _
    // Predicated region
    $region6: #{tpu_custom_call.1} parent=1 // pred_check
      _
    $region7: #{tpu_custom_call.1} parent=1 // pred_check_branch
      %29 = sbr.rel (0) target = $region9
    $region8: #{tpu_custom_call.1} parent=1 // pred_region
      _
    $region9: #{tpu_custom_call.1} parent=1 // pred_fallthru
      _
    // Predicated region
    $region10: #{tpu_custom_call.1} parent=1 // pred_check
      _
    $region11: #{tpu_custom_call.1} parent=1 // pred_check_branch
      %31 = sbr.rel (0) target = $region13
    $region12: #{tpu_custom_call.1} parent=1 // pred_region
      _
    $region13: #{tpu_custom_call.1} parent=1 // pred_fallthru
      _
    // Predicated region
    $region14: #{tpu_custom_call.1} parent=1 // pred_check
      _
    $region15: #{tpu_custom_call.1} parent=1 // pred_check_branch
      %33 = sbr.rel (0) target = $region17
    $region16: #{tpu_custom_call.1} parent=1 // pred_region
      _
    $region17: #{tpu_custom_call.1} parent=1 // pred_fallthru
      _
    // Predicated region
    $region18: #{tpu_custom_call.1} parent=1 // pred_check
      _
    $region19: #{tpu_custom_call.1} parent=1 // pred_check_branch
      %35 = sbr.rel (0) target = $region21
    $region20: #{tpu_custom_call.1} parent=1 // pred_region
      _
    $region21: #{tpu_custom_call.1} parent=1 // pred_fallthru
      _
    // Predicated region
    $region22: #{tpu_custom_call.1} parent=1 // pred_check
      _
    $region23: #{tpu_custom_call.1} parent=1 // pred_check_branch
      %37 = sbr.rel (0) target = $region25
    $region24: #{tpu_custom_call.1} parent=1 // pred_region
      _
    $region25: #{tpu_custom_call.1} parent=1 // pred_fallthru
      _
    // Predicated region
    $region26: #{tpu_custom_call.1} parent=1 // pred_check
      _
    $region27: #{tpu_custom_call.1} parent=1 // pred_check_branch
      %39 = sbr.rel (0) target = $region29
    $region28: #{tpu_custom_call.1} parent=1 // pred_region
      _
    $region29: #{tpu_custom_call.1} parent=1 // pred_fallthru
      _
    // Predicated region
    $region30: #{tpu_custom_call.1} parent=1 // pred_check
      _
    $region31: #{tpu_custom_call.1} parent=1 // pred_check_branch
      %41 = sbr.rel (0) target = $region33
    $region32: #{tpu_custom_call.1} parent=1 // pred_region
      _
    $region33: #{tpu_custom_call.1} parent=1 // pred_fallthru
      _
    // Predicated region
    $region34: #{tpu_custom_call.1} parent=1 // pred_check
      _
    $region35: #{tpu_custom_call.1} parent=1 // pred_check_branch
      %43 = sbr.rel (0) target = $region37
    $region36: #{tpu_custom_call.1} parent=1 // pred_region
      _
    $region37: #{tpu_custom_call.1} parent=1 // pred_fallthru
      _
    // Predicated region
    $region38: #{tpu_custom_call.1} parent=1 // pred_check
      _
    $region39: #{tpu_custom_call.1} parent=1 // pred_check_branch
      %45 = sbr.rel (0) target = $region41
    $region40: #{tpu_custom_call.1} parent=1 // pred_region
      _
    $region41: #{tpu_custom_call.1} parent=1 // pred_fallthru
      _
    // Predicated region
    $region42: #{tpu_custom_call.1} parent=1 // pred_check
      _
    $region43: #{tpu_custom_call.1} parent=1 // pred_check_branch
      %47 = sbr.rel (0) target = $region45
    $region44: #{tpu_custom_call.1} parent=1 // pred_region
      _
    $region45: #{tpu_custom_call.1} parent=1 // pred_fallthru
      _
    // Predicated region
    $region46: #{tpu_custom_call.1} parent=1 // pred_check
      _
    $region47: #{tpu_custom_call.1} parent=1 // pred_check_branch
      %49 = sbr.rel (0) target = $region49
    $region48: #{tpu_custom_call.1} parent=1 // pred_region
      _
    $region49: #{tpu_custom_call.1} parent=1 // pred_fallthru
      _
    // Predicated region
    $region50: #{tpu_custom_call.1} parent=1 // pred_check
      _
    $region51: #{tpu_custom_call.1} parent=1 // pred_check_branch
      %51 = sbr.rel (0) target = $region53
    $region52: #{tpu_custom_call.1} parent=1 // pred_region
      _
    $region53: #{tpu_custom_call.1} parent=1 // pred_fallthru
      _
    // Predicated region
    $region54: #{tpu_custom_call.1} parent=1 // pred_check
      _
    $region55: #{tpu_custom_call.1} parent=1 // pred_check_branch
      %53 = sbr.rel (0) target = $region57
    $region56: #{tpu_custom_call.1} parent=1 // pred_region
      _
    $region57: #{tpu_custom_call.1} parent=1 // pred_fallthru
      _
    // Predicated region
    $region58: #{tpu_custom_call.1} parent=1 // pred_check
      _
    $region59: #{tpu_custom_call.1} parent=1 // pred_check_branch
      %55 = sbr.rel (0) target = $region61
    $region60: #{tpu_custom_call.1} parent=1 // pred_region
      _
    $region61: #{tpu_custom_call.1} parent=1 // pred_fallthru
      _
    %v56 = vld [vmem:[%s1] sm:$0xff]
    %v57 = vld [vmem:[%s1 + $0x8] sm:$0xff]
    %v58 = vld [vmem:[%s1 + $0x10] sm:$0xff]
    %v59 = vld [vmem:[%s1 + $0x18] sm:$0xff]
    %v60 = vld [vmem:[%s2] sm:$0xff]
    %v61 = vld [vmem:[%s2 + $0x8] sm:$0xff]
    %v62 = vld [vmem:[%s2 + $0x10] sm:$0xff]
    %v63 = vld [vmem:[%s2 + $0x18] sm:$0xff]
    %v64 = vld [vmem:[%s3] sm:$0xff]
    %v65 = vld [vmem:[%s3 + $0x8] sm:$0xff]
    %v66 = vld [vmem:[%s3 + $0x10] sm:$0xff]
    %v67 = vld [vmem:[%s3 + $0x18] sm:$0xff]
    %v68 = vld [vmem:[%s4] sm:$0xff]
    %v69 = vld [vmem:[%s4 + $0x8] sm:$0xff]
    %v70 = vld [vmem:[%s4 + $0x10] sm:$0xff]
    %v71 = vld [vmem:[%s4 + $0x18] sm:$0xff]
    %v72 = vld [vmem:[%s5] sm:$0xff]
    %v73 = vld [vmem:[%s5 + $0x8] sm:$0xff]
    %v74 = vld [vmem:[%s5 + $0x10] sm:$0xff]
    %v75 = vld [vmem:[%s5 + $0x18] sm:$0xff]
    %v76 = vld [vmem:[%s5 + $0x20] sm:$0xff]
    %v77 = vld [vmem:[%s5 + $0x28] sm:$0xff]
    %v78 = vld [vmem:[%s5 + $0x30] sm:$0xff]
    %v79 = vld [vmem:[%s5 + $0x38] sm:$0xff]
    %v80 = vld [vmem:[%s6] sm:$0xff]
    %v81 = vld [vmem:[%s6 + $0x8] sm:$0xff]
    %v82 = vld [vmem:[%s6 + $0x10] sm:$0xff]
    %v83 = vld [vmem:[%s6 + $0x18] sm:$0xff]
    %v84 = vld [vmem:[%s6 + $0x20] sm:$0xff]
    %v85 = vld [vmem:[%s6 + $0x28] sm:$0xff]
    %v86 = vld [vmem:[%s6 + $0x30] sm:$0xff]
    %v87 = vld [vmem:[%s6 + $0x38] sm:$0xff]
    %v88 = vld [vmem:[%s7] sm:$0x1]
    %v89 = vld [vmem:[#allocation2] sm:$0x1]
    %v90 = vld [vmem:[%s0] sm:$0xff]
    %v91 = vld [vmem:[%s0 + $0x8] sm:$0xff]
    %v92 = vld [vmem:[%s0 + $0x10] sm:$0xff]
    %v93 = vld [vmem:[%s0 + $0x18] sm:$0xff]
    %v94 = vld [vmem:[%s0 + $0x20] sm:$0xff]
    %v95 = vld [vmem:[%s0 + $0x28] sm:$0xff]
    %v96 = vld [vmem:[%s0 + $0x30] sm:$0xff]
    %v97 = vld [vmem:[%s0 + $0x38] sm:$0xff]
    %99 = vset.pattern.permute.xlu0 0
    %100 = vperm.xlu0 %99, %v60
    %v101 = vpop.permute.xlu0 %100
    %104 = vset.pattern.permute.xlu0 0
    %105 = vperm.xlu0 %104, %v61
    %v106 = vpop.permute.xlu0 %105
    %109 = vset.pattern.permute.xlu0 0
    %110 = vperm.xlu0 %109, %v62
    %v111 = vpop.permute.xlu0 %110
    %114 = vset.pattern.permute.xlu0 0
    %115 = vperm.xlu0 %114, %v63
    %v116 = vpop.permute.xlu0 %115
    %vm118 = vcmask 261120
    %v120 = vsel %vm118, %v56, 0
    %v123 = vsel %vm118, %v57, 0
    %v126 = vsel %vm118, %v58, 0
    %v129 = vsel %vm118, %v59, 0
    %131 = vmatprep.subr.mxu0 %v91
    %132 = vmatpush1.msra.mxu0 %v90
    %133 = vmatprep.subr.mxu0 %v93
    %134 = vmatpush1.msra.mxu0 %v92
    %135 = vmatprep.subr.mxu0 %v95
    %136 = vmatpush1.msra.mxu0 %v94
    %137 = vmatprep.subr.mxu0 %v97
    %138 = vmatpush1.msra.mxu0 %v96
    %139 = vmatprep.subr.mxu0 0.0
    %140 = vmatpush1.msra.mxu0 0.0
    %141 = vmatprep.subr.mxu0 0.0
    %142 = vmatpush1.msra.mxu0 0.0
    %143 = vmatprep.subr.mxu0 0.0
    %144 = vmatpush1.msra.mxu0 0.0
    %145 = vmatprep.subr.mxu0 0.0
    %146 = vmatpush1.msra.mxu0 0.0
    %147 = vmatprep.subr.mxu0 0.0
    %148 = vmatpush1.msra.mxu0 0.0
    %149 = vmatprep.subr.mxu0 0.0
    %150 = vmatpush1.msra.mxu0 0.0
    %151 = vmatprep.subr.mxu0 0.0
    %152 = vmatpush1.msra.mxu0 0.0
    %153 = vmatprep.subr.mxu0 0.0
    %154 = vmatpush1.msra.mxu0 0.0
    %155 = vmatprep.subr.mxu0 0.0
    %156 = vmatpush1.msra.mxu0 0.0
    %157 = vmatprep.subr.mxu0 0.0
    %158 = vmatpush1.msra.mxu0 0.0
    %159 = vmatprep.subr.mxu0 0.0
    %160 = vmatpush1.msra.mxu0 0.0
    %161 = vmatprep.subr.mxu0 0.0
    %162 = vmatpush1.msra.mxu0 0.0
    %163 = vmatprep.subr.mxu0 0.0
    %164 = vmatpush1.msra.mxu0 0.0
    %165 = vmatprep.subr.mxu0 0.0
    %166 = vmatpush1.msra.mxu0 0.0
    %167 = vmatprep.subr.mxu0 0.0
    %168 = vmatpush1.msra.mxu0 0.0
    %169 = vmatprep.subr.mxu0 0.0
    %170 = vmatpush1.msra.mxu0 0.0
    %171 = vmatprep.subr.mxu0 0.0
    %172 = vmatpush1.msra.mxu0 0.0
    %173 = vmatprep.subr.mxu0 0.0
    %174 = vmatpush1.msra.mxu0 0.0
    %175 = vmatprep.subr.mxu0 0.0
    %176 = vmatpush1.msra.mxu0 0.0
    %177 = vmatprep.subr.mxu0 0.0
    %178 = vmatpush1.msra.mxu0 0.0
    %179 = vmatprep.subr.mxu0 0.0
    %180 = vmatpush1.msra.mxu0 0.0
    %181 = vmatprep.subr.mxu0 0.0
    %182 = vmatpush1.msra.mxu0 0.0
    %183 = vmatprep.subr.mxu0 0.0
    %184 = vmatpush1.msra.mxu0 0.0
    %185 = vmatprep.subr.mxu0 0.0
    %186 = vmatpush1.msra.mxu0 0.0
    %187 = vmatprep.subr.mxu0 0.0
    %188 = vmatpush1.msra.mxu0 0.0
    %189 = vmatprep.subr.mxu0 0.0
    %190 = vmatpush1.msra.mxu0 0.0
    %191 = vmatprep.subr.mxu0 0.0
    %192 = vmatpush1.msra.mxu0 0.0
    %193 = vmatprep.subr.mxu0 0.0
    %194 = vmatpush1.msra.mxu0 0.0
    %195 = vmatprep.mubr.f32.mxu0 0.0
    %196 = vmatmul.mubr.f32.gmra.mrb[0].mxu0 %v120
    %v197 = vpop.f32.mrb[0].mxu0
    %v198 = vadd.f32 %v101, %v197
    %v199 = vpop.f32.mrb[0].mxu0
    %v200 = vadd.f32 %v101, %v199
    %201 = vmatprep.mubr.f32.mxu0 0.0
    %202 = vmatmul.mubr.f32.gmra.mrb[0].mxu0 %v123
    %v203 = vpop.f32.mrb[0].mxu0
    %v204 = vadd.f32 %v106, %v203
    %v205 = vpop.f32.mrb[0].mxu0
    %v206 = vadd.f32 %v106, %v205
    %207 = vmatprep.mubr.f32.mxu0 0.0
    %208 = vmatmul.mubr.f32.gmra.mrb[0].mxu0 %v126
    %v209 = vpop.f32.mrb[0].mxu0
    %v210 = vadd.f32 %v111, %v209
    %v211 = vpop.f32.mrb[0].mxu0
    %v212 = vadd.f32 %v111, %v211
    %213 = vmatprep.mubr.f32.mxu0 0.0
    %214 = vmatmul.mubr.f32.gmra.mrb[0].mxu0 %v129
    %v215 = vpop.f32.mrb[0].mxu0
    %v216 = vadd.f32 %v116, %v215
    %v217 = vpop.f32.mrb[0].mxu0
    %v218 = vadd.f32 %v116, %v217
    %219 = vdwg.mxu0
    %v220 = vmax.f32 %v198, 0.0
    %v221 = vmax.f32 %v200, 0.0
    %v222 = vmax.f32 %v204, 0.0
    %v223 = vmax.f32 %v206, 0.0
    %v224 = vmax.f32 %v210, 0.0
    %v225 = vmax.f32 %v212, 0.0
    %v226 = vmax.f32 %v216, 0.0
    %v227 = vmax.f32 %v218, 0.0
    %229 = vset.pattern.permute.xlu0 0
    %230 = vperm.xlu0 %229, %v68
    %v231 = vpop.permute.xlu0 %230
    %234 = vset.pattern.permute.xlu0 0
    %235 = vperm.xlu0 %234, %v69
    %v236 = vpop.permute.xlu0 %235
    %239 = vset.pattern.permute.xlu0 0
    %240 = vperm.xlu0 %239, %v70
    %v241 = vpop.permute.xlu0 %240
    %244 = vset.pattern.permute.xlu0 0
    %245 = vperm.xlu0 %244, %v71
    %v246 = vpop.permute.xlu0 %245
    %v249 = vsel %vm118, %v64, 0
    %v252 = vsel %vm118, %v65, 0
    %v255 = vsel %vm118, %v66, 0
    %v258 = vsel %vm118, %v67, 0
    %260 = vmatprep.subr.mxu0 %v221
    %261 = vmatpush1.msra.mxu0 %v220
    %262 = vmatprep.subr.mxu0 %v223
    %263 = vmatpush1.msra.mxu0 %v222
    %264 = vmatprep.subr.mxu0 %v225
    %265 = vmatpush1.msra.mxu0 %v224
    %266 = vmatprep.subr.mxu0 %v227
    %267 = vmatpush1.msra.mxu0 %v226
    %268 = vmatprep.subr.mxu0 0.0
    %269 = vmatpush1.msra.mxu0 0.0
    %270 = vmatprep.subr.mxu0 0.0
    %271 = vmatpush1.msra.mxu0 0.0
    %272 = vmatprep.subr.mxu0 0.0
    %273 = vmatpush1.msra.mxu0 0.0
    %274 = vmatprep.subr.mxu0 0.0
    %275 = vmatpush1.msra.mxu0 0.0
    %276 = vmatprep.subr.mxu0 0.0
    %277 = vmatpush1.msra.mxu0 0.0
    %278 = vmatprep.subr.mxu0 0.0
    %279 = vmatpush1.msra.mxu0 0.0
    %280 = vmatprep.subr.mxu0 0.0
    %281 = vmatpush1.msra.mxu0 0.0
    %282 = vmatprep.subr.mxu0 0.0
    %283 = vmatpush1.msra.mxu0 0.0
    %284 = vmatprep.subr.mxu0 0.0
    %285 = vmatpush1.msra.mxu0 0.0
    %286 = vmatprep.subr.mxu0 0.0
    %287 = vmatpush1.msra.mxu0 0.0
    %288 = vmatprep.subr.mxu0 0.0
    %289 = vmatpush1.msra.mxu0 0.0
    %290 = vmatprep.subr.mxu0 0.0
    %291 = vmatpush1.msra.mxu0 0.0
    %292 = vmatprep.subr.mxu0 0.0
    %293 = vmatpush1.msra.mxu0 0.0
    %294 = vmatprep.subr.mxu0 0.0
    %295 = vmatpush1.msra.mxu0 0.0
    %296 = vmatprep.subr.mxu0 0.0
    %297 = vmatpush1.msra.mxu0 0.0
    %298 = vmatprep.subr.mxu0 0.0
    %299 = vmatpush1.msra.mxu0 0.0
    %300 = vmatprep.subr.mxu0 0.0
    %301 = vmatpush1.msra.mxu0 0.0
    %302 = vmatprep.subr.mxu0 0.0
    %303 = vmatpush1.msra.mxu0 0.0
    %304 = vmatprep.subr.mxu0 0.0
    %305 = vmatpush1.msra.mxu0 0.0
    %306 = vmatprep.subr.mxu0 0.0
    %307 = vmatpush1.msra.mxu0 0.0
    %308 = vmatprep.subr.mxu0 0.0
    %309 = vmatpush1.msra.mxu0 0.0
    %310 = vmatprep.subr.mxu0 0.0
    %311 = vmatpush1.msra.mxu0 0.0
    %312 = vmatprep.subr.mxu0 0.0
    %313 = vmatpush1.msra.mxu0 0.0
    %314 = vmatprep.subr.mxu0 0.0
    %315 = vmatpush1.msra.mxu0 0.0
    %316 = vmatprep.subr.mxu0 0.0
    %317 = vmatpush1.msra.mxu0 0.0
    %318 = vmatprep.subr.mxu0 0.0
    %319 = vmatpush1.msra.mxu0 0.0
    %320 = vmatprep.subr.mxu0 0.0
    %321 = vmatpush1.msra.mxu0 0.0
    %322 = vmatprep.subr.mxu0 0.0
    %323 = vmatpush1.msra.mxu0 0.0
    %324 = vmatprep.mubr.f32.mxu0 0.0
    %325 = vmatmul.mubr.f32.gmra.mrb[0].mxu0 %v249
    %v326 = vpop.f32.mrb[0].mxu0
    %v327 = vadd.f32 %v231, %v326
    %v328 = vpop.f32.mrb[0].mxu0
    %v329 = vadd.f32 %v231, %v328
    %330 = vmatprep.mubr.f32.mxu0 0.0
    %331 = vmatmul.mubr.f32.gmra.mrb[0].mxu0 %v252
    %v332 = vpop.f32.mrb[0].mxu0
    %v333 = vadd.f32 %v236, %v332
    %v334 = vpop.f32.mrb[0].mxu0
    %v335 = vadd.f32 %v236, %v334
    %336 = vmatprep.mubr.f32.mxu0 0.0
    %337 = vmatmul.mubr.f32.gmra.mrb[0].mxu0 %v255
    %v338 = vpop.f32.mrb[0].mxu0
    %v339 = vadd.f32 %v241, %v338
    %v340 = vpop.f32.mrb[0].mxu0
    %v341 = vadd.f32 %v241, %v340
    %342 = vmatprep.mubr.f32.mxu0 0.0
    %343 = vmatmul.mubr.f32.gmra.mrb[0].mxu0 %v258
    %v344 = vpop.f32.mrb[0].mxu0
    %v345 = vadd.f32 %v246, %v344
    %v346 = vpop.f32.mrb[0].mxu0
    %v347 = vadd.f32 %v246, %v346
    %348 = vdwg.mxu0
    %v349 = vmax.f32 %v327, 0.0
    %v350 = vmax.f32 %v329, 0.0
    %v351 = vmax.f32 %v333, 0.0
    %v352 = vmax.f32 %v335, 0.0
    %v353 = vmax.f32 %v339, 0.0
    %v354 = vmax.f32 %v341, 0.0
    %v355 = vmax.f32 %v345, 0.0
    %v356 = vmax.f32 %v347, 0.0
    %357 = vst [vmem:[#allocation3] sm:$0xff] %v349
    %358 = vst [vmem:[#allocation3 + $0x8] sm:$0xff] %v350
    %359 = vst [vmem:[#allocation3 + $0x10] sm:$0xff] %v351
    %360 = vst [vmem:[#allocation3 + $0x18] sm:$0xff] %v352
    %361 = vst [vmem:[#allocation3 + $0x20] sm:$0xff] %v353
    %362 = vst [vmem:[#allocation3 + $0x28] sm:$0xff] %v354
    %363 = vst [vmem:[#allocation3 + $0x30] sm:$0xff] %v355
    %364 = vst [vmem:[#allocation3 + $0x38] sm:$0xff] %v356
    %366 = vset.pattern.permute.xlu0 0
    %367 = vperm.xlu0 %366, %v80
    %v368 = vpop.permute.xlu0 %367
    %371 = vset.pattern.permute.xlu0 0
    %372 = vperm.xlu0 %371, %v81
    %v373 = vpop.permute.xlu0 %372
    %376 = vset.pattern.permute.xlu0 0
    %377 = vperm.xlu0 %376, %v82
    %v378 = vpop.permute.xlu0 %377
    %381 = vset.pattern.permute.xlu0 0
    %382 = vperm.xlu0 %381, %v83
    %v383 = vpop.permute.xlu0 %382
    %386 = vset.pattern.permute.xlu0 0
    %387 = vperm.xlu0 %386, %v84
    %v388 = vpop.permute.xlu0 %387
    %391 = vset.pattern.permute.xlu0 0
    %392 = vperm.xlu0 %391, %v85
    %v393 = vpop.permute.xlu0 %392
    %396 = vset.pattern.permute.xlu0 0
    %397 = vperm.xlu0 %396, %v86
    %v398 = vpop.permute.xlu0 %397
    %401 = vset.pattern.permute.xlu0 0
    %402 = vperm.xlu0 %401, %v87
    %v403 = vpop.permute.xlu0 %402
    %v406 = vsel %vm118, %v72, 0
    %v409 = vsel %vm118, %v73, 0
    %v412 = vsel %vm118, %v74, 0
    %v415 = vsel %vm118, %v75, 0
    %v418 = vsel %vm118, %v76, 0
    %v421 = vsel %vm118, %v77, 0
    %v424 = vsel %vm118, %v78, 0
    %v427 = vsel %vm118, %v79, 0
    %429 = vmatprep.subr.mxu0 %v350
    %430 = vmatpush1.msra.mxu0 %v349
    %431 = vmatprep.subr.mxu0 %v352
    %432 = vmatpush1.msra.mxu0 %v351
    %433 = vmatprep.subr.mxu0 %v354
    %434 = vmatpush1.msra.mxu0 %v353
    %435 = vmatprep.subr.mxu0 %v356
    %436 = vmatpush1.msra.mxu0 %v355
    %437 = vmatprep.subr.mxu0 0.0
    %438 = vmatpush1.msra.mxu0 0.0
    %439 = vmatprep.subr.mxu0 0.0
    %440 = vmatpush1.msra.mxu0 0.0
    %441 = vmatprep.subr.mxu0 0.0
    %442 = vmatpush1.msra.mxu0 0.0
    %443 = vmatprep.subr.mxu0 0.0
    %444 = vmatpush1.msra.mxu0 0.0
    %445 = vmatprep.subr.mxu0 0.0
    %446 = vmatpush1.msra.mxu0 0.0
    %447 = vmatprep.subr.mxu0 0.0
    %448 = vmatpush1.msra.mxu0 0.0
    %449 = vmatprep.subr.mxu0 0.0
    %450 = vmatpush1.msra.mxu0 0.0
    %451 = vmatprep.subr.mxu0 0.0
    %452 = vmatpush1.msra.mxu0 0.0
    %453 = vmatprep.subr.mxu0 0.0
    %454 = vmatpush1.msra.mxu0 0.0
    %455 = vmatprep.subr.mxu0 0.0
    %456 = vmatpush1.msra.mxu0 0.0
    %457 = vmatprep.subr.mxu0 0.0
    %458 = vmatpush1.msra.mxu0 0.0
    %459 = vmatprep.subr.mxu0 0.0
    %460 = vmatpush1.msra.mxu0 0.0
    %461 = vmatprep.subr.mxu0 0.0
    %462 = vmatpush1.msra.mxu0 0.0
    %463 = vmatprep.subr.mxu0 0.0
    %464 = vmatpush1.msra.mxu0 0.0
    %465 = vmatprep.subr.mxu0 0.0
    %466 = vmatpush1.msra.mxu0 0.0
    %467 = vmatprep.subr.mxu0 0.0
    %468 = vmatpush1.msra.mxu0 0.0
    %469 = vmatprep.subr.mxu0 0.0
    %470 = vmatpush1.msra.mxu0 0.0
    %471 = vmatprep.subr.mxu0 0.0
    %472 = vmatpush1.msra.mxu0 0.0
    %473 = vmatprep.subr.mxu0 0.0
    %474 = vmatpush1.msra.mxu0 0.0
    %475 = vmatprep.subr.mxu0 0.0
    %476 = vmatpush1.msra.mxu0 0.0
    %477 = vmatprep.subr.mxu0 0.0
    %478 = vmatpush1.msra.mxu0 0.0
    %479 = vmatprep.subr.mxu0 0.0
    %480 = vmatpush1.msra.mxu0 0.0
    %481 = vmatprep.subr.mxu0 0.0
    %482 = vmatpush1.msra.mxu0 0.0
    %483 = vmatprep.subr.mxu0 0.0
    %484 = vmatpush1.msra.mxu0 0.0
    %485 = vmatprep.subr.mxu0 0.0
    %486 = vmatpush1.msra.mxu0 0.0
    %487 = vmatprep.subr.mxu0 0.0
    %488 = vmatpush1.msra.mxu0 0.0
    %489 = vmatprep.subr.mxu0 0.0
    %490 = vmatpush1.msra.mxu0 0.0
    %491 = vmatprep.subr.mxu0 0.0
    %492 = vmatpush1.msra.mxu0 0.0
    %493 = vmatprep.mubr.f32.mxu0 0.0
    %494 = vmatmul.mubr.f32.gmra.mrb[0].mxu0 %v406
    %v495 = vpop.f32.mrb[0].mxu0
    %v496 = vadd.f32 %v368, %v495
    %v497 = vpop.f32.mrb[0].mxu0
    %v498 = vadd.f32 %v368, %v497
    %499 = vmatprep.mubr.f32.mxu0 0.0
    %500 = vmatmul.mubr.f32.gmra.mrb[0].mxu0 %v409
    %v501 = vpop.f32.mrb[0].mxu0
    %v502 = vadd.f32 %v373, %v501
    %v503 = vpop.f32.mrb[0].mxu0
    %v504 = vadd.f32 %v373, %v503
    %505 = vmatprep.mubr.f32.mxu0 0.0
    %506 = vmatmul.mubr.f32.gmra.mrb[0].mxu0 %v412
    %v507 = vpop.f32.mrb[0].mxu0
    %v508 = vadd.f32 %v378, %v507
    %v509 = vpop.f32.mrb[0].mxu0
    %v510 = vadd.f32 %v378, %v509
    %511 = vmatprep.mubr.f32.mxu0 0.0
    %512 = vmatmul.mubr.f32.gmra.mrb[0].mxu0 %v415
    %v513 = vpop.f32.mrb[0].mxu0
    %v514 = vadd.f32 %v383, %v513
    %v515 = vpop.f32.mrb[0].mxu0
    %v516 = vadd.f32 %v383, %v515
    %517 = vmatprep.mubr.f32.mxu0 0.0
    %518 = vmatmul.mubr.f32.gmra.mrb[0].mxu0 %v418
    %v519 = vpop.f32.mrb[0].mxu0
    %v520 = vadd.f32 %v388, %v519
    %v521 = vpop.f32.mrb[0].mxu0
    %v522 = vadd.f32 %v388, %v521
    %523 = vmatprep.mubr.f32.mxu0 0.0
    %524 = vmatmul.mubr.f32.gmra.mrb[0].mxu0 %v421
    %v525 = vpop.f32.mrb[0].mxu0
    %v526 = vadd.f32 %v393, %v525
    %v527 = vpop.f32.mrb[0].mxu0
    %v528 = vadd.f32 %v393, %v527
    %529 = vmatprep.mubr.f32.mxu0 0.0
    %530 = vmatmul.mubr.f32.gmra.mrb[0].mxu0 %v424
    %v531 = vpop.f32.mrb[0].mxu0
    %v532 = vadd.f32 %v398, %v531
    %v533 = vpop.f32.mrb[0].mxu0
    %v534 = vadd.f32 %v398, %v533
    %535 = vmatprep.mubr.f32.mxu0 0.0
    %536 = vmatmul.mubr.f32.gmra.mrb[0].mxu0 %v427
    %v537 = vpop.f32.mrb[0].mxu0
    %v538 = vadd.f32 %v403, %v537
    %v539 = vpop.f32.mrb[0].mxu0
    %v540 = vadd.f32 %v403, %v539
    %541 = vdwg.mxu0
    %v542 = vmax.f32 %v496, 0.0
    %v543 = vmax.f32 %v498, 0.0
    %v544 = vmax.f32 %v502, 0.0
    %v545 = vmax.f32 %v504, 0.0
    %v546 = vmax.f32 %v508, 0.0
    %v547 = vmax.f32 %v510, 0.0
    %v548 = vmax.f32 %v514, 0.0
    %v549 = vmax.f32 %v516, 0.0
    %v550 = vmax.f32 %v520, 0.0
    %v551 = vmax.f32 %v522, 0.0
    %v552 = vmax.f32 %v526, 0.0
    %v553 = vmax.f32 %v528, 0.0
    %v554 = vmax.f32 %v532, 0.0
    %v555 = vmax.f32 %v534, 0.0
    %v556 = vmax.f32 %v538, 0.0
    %v557 = vmax.f32 %v540, 0.0
    %559 = vset.pattern.permute.xlu0 0
    %560 = vperm.xlu0 %559, %v89
    %v561 = vpop.permute.xlu0 %560
    %v563 = vlaneseq
    %v564 = vshrl.u32 %v563, 7
    %v565 = vsub.s32 0, %v564
    %v566 = vrot.slane %v561, %v565
    %vm567 = vcmask 523264
    %v569 = vsel %vm567, %v88, 0
    %571 = vmatprep.subr.mxu0 %v543
    %572 = vmatpush1.msra.mxu0 %v542
    %573 = vmatprep.subr.mxu0 %v545
    %574 = vmatpush1.msra.mxu0 %v544
    %575 = vmatprep.subr.mxu0 %v547
    %576 = vmatpush1.msra.mxu0 %v546
    %577 = vmatprep.subr.mxu0 %v549
    %578 = vmatpush1.msra.mxu0 %v548
    %579 = vmatprep.subr.mxu0 %v551
    %580 = vmatpush1.msra.mxu0 %v550
    %581 = vmatprep.subr.mxu0 %v553
    %582 = vmatpush1.msra.mxu0 %v552
    %583 = vmatprep.subr.mxu0 %v555
    %584 = vmatpush1.msra.mxu0 %v554
    %585 = vmatprep.subr.mxu0 %v557
    %586 = vmatpush1.msra.mxu0 %v556
    %587 = vmatprep.subr.mxu0 0.0
    %588 = vmatpush1.msra.mxu0 0.0
    %589 = vmatprep.subr.mxu0 0.0
    %590 = vmatpush1.msra.mxu0 0.0
    %591 = vmatprep.subr.mxu0 0.0
    %592 = vmatpush1.msra.mxu0 0.0
    %593 = vmatprep.subr.mxu0 0.0
    %594 = vmatpush1.msra.mxu0 0.0
    %595 = vmatprep.subr.mxu0 0.0
    %596 = vmatpush1.msra.mxu0 0.0
    %597 = vmatprep.subr.mxu0 0.0
    %598 = vmatpush1.msra.mxu0 0.0
    %599 = vmatprep.subr.mxu0 0.0
    %600 = vmatpush1.msra.mxu0 0.0
    %601 = vmatprep.subr.mxu0 0.0
    %602 = vmatpush1.msra.mxu0 0.0
    %603 = vmatprep.subr.mxu0 0.0
    %604 = vmatpush1.msra.mxu0 0.0
    %605 = vmatprep.subr.mxu0 0.0
    %606 = vmatpush1.msra.mxu0 0.0
    %607 = vmatprep.subr.mxu0 0.0
    %608 = vmatpush1.msra.mxu0 0.0
    %609 = vmatprep.subr.mxu0 0.0
    %610 = vmatpush1.msra.mxu0 0.0
    %611 = vmatprep.subr.mxu0 0.0
    %612 = vmatpush1.msra.mxu0 0.0
    %613 = vmatprep.subr.mxu0 0.0
    %614 = vmatpush1.msra.mxu0 0.0
    %615 = vmatprep.subr.mxu0 0.0
    %616 = vmatpush1.msra.mxu0 0.0
    %617 = vmatprep.subr.mxu0 0.0
    %618 = vmatpush1.msra.mxu0 0.0
    %619 = vmatprep.subr.mxu0 0.0
    %620 = vmatpush1.msra.mxu0 0.0
    %621 = vmatprep.subr.mxu0 0.0
    %622 = vmatpush1.msra.mxu0 0.0
    %623 = vmatprep.subr.mxu0 0.0
    %624 = vmatpush1.msra.mxu0 0.0
    %625 = vmatprep.subr.mxu0 0.0
    %626 = vmatpush1.msra.mxu0 0.0
    %627 = vmatprep.subr.mxu0 0.0
    %628 = vmatpush1.msra.mxu0 0.0
    %629 = vmatprep.subr.mxu0 0.0
    %630 = vmatpush1.msra.mxu0 0.0
    %631 = vmatprep.subr.mxu0 0.0
    %632 = vmatpush1.msra.mxu0 0.0
    %633 = vmatprep.subr.mxu0 0.0
    %634 = vmatpush1.msra.mxu0 0.0
    %635 = vmatprep.mubr.f32.mxu0 0.0
    %636 = vmatmul.mubr.f32.gmra.mrb[0].mxu0 %v569
    %v637 = vpop.f32.mrb[0].mxu0
    %v638 = vadd.f32 %v566, %v637
    %v639 = vpop.f32.mrb[0].mxu0
    %v640 = vadd.f32 %v566, %v639
    %641 = vdwg.mxu0
    %v642 = vsub.f32 0.0, %v638
    %v643 = vsub.f32 0.0, %v640
    %v644 = vmul.f32 %v642, 1.442695
    %v645 = vpow.pop %v644
    %v646 = vmul.f32 %v643, 1.442695
    %v647 = vpow.pop %v646
    %v648 = vadd.f32 %v645, 1.0
    %v649 = vadd.f32 %v647, 1.0
    %v650 = vrcp.pop %v648
    %v651 = vmul.f32 1.0, %v650
    %v652 = vrcp.pop %v649
    %v653 = vmul.f32 1.0, %v652
    %s654 = scalar_lea.vmem %s0, 64
    %v655 = vld [vmem:[%s654] sm:$0xff]
    %v656 = vld [vmem:[%s654 + $0x8] sm:$0xff]
    %v657 = vld [vmem:[%s654 + $0x10] sm:$0xff]
    %v658 = vld [vmem:[%s654 + $0x18] sm:$0xff]
    %v659 = vld [vmem:[%s654 + $0x20] sm:$0xff]
    %v660 = vld [vmem:[%s654 + $0x28] sm:$0xff]
    %v661 = vld [vmem:[%s654 + $0x30] sm:$0xff]
    %v662 = vld [vmem:[%s654 + $0x38] sm:$0xff]
    %663 = vmatprep.subr.mxu0 %v656
    %664 = vmatpush1.msra.mxu0 %v655
    %665 = vmatprep.subr.mxu0 %v658
    %666 = vmatpush1.msra.mxu0 %v657
    %667 = vmatprep.subr.mxu0 %v660
    %668 = vmatpush1.msra.mxu0 %v659
    %669 = vmatprep.subr.mxu0 %v662
    %670 = vmatpush1.msra.mxu0 %v661
    %671 = vmatprep.subr.mxu0 0.0
    %672 = vmatpush1.msra.mxu0 0.0
    %673 = vmatprep.subr.mxu0 0.0
    %674 = vmatpush1.msra.mxu0 0.0
    %675 = vmatprep.subr.mxu0 0.0
    %676 = vmatpush1.msra.mxu0 0.0
    %677 = vmatprep.subr.mxu0 0.0
    %678 = vmatpush1.msra.mxu0 0.0
    %679 = vmatprep.subr.mxu0 0.0
    %680 = vmatpush1.msra.mxu0 0.0
    %681 = vmatprep.subr.mxu0 0.0
    %682 = vmatpush1.msra.mxu0 0.0
    %683 = vmatprep.subr.mxu0 0.0
    %684 = vmatpush1.msra.mxu0 0.0
    %685 = vmatprep.subr.mxu0 0.0
    %686 = vmatpush1.msra.mxu0 0.0
    %687 = vmatprep.subr.mxu0 0.0
    %688 = vmatpush1.msra.mxu0 0.0
    %689 = vmatprep.subr.mxu0 0.0
    %690 = vmatpush1.msra.mxu0 0.0
    %691 = vmatprep.subr.mxu0 0.0
    %692 = vmatpush1.msra.mxu0 0.0
    %693 = vmatprep.subr.mxu0 0.0
    %694 = vmatpush1.msra.mxu0 0.0
    %695 = vmatprep.subr.mxu0 0.0
    %696 = vmatpush1.msra.mxu0 0.0
    %697 = vmatprep.subr.mxu0 0.0
    %698 = vmatpush1.msra.mxu0 0.0
    %699 = vmatprep.subr.mxu0 0.0
    %700 = vmatpush1.msra.mxu0 0.0
    %701 = vmatprep.subr.mxu0 0.0
    %702 = vmatpush1.msra.mxu0 0.0
    %703 = vmatprep.subr.mxu0 0.0
    %704 = vmatpush1.msra.mxu0 0.0
    %705 = vmatprep.subr.mxu0 0.0
    %706 = vmatpush1.msra.mxu0 0.0
    %707 = vmatprep.subr.mxu0 0.0
    %708 = vmatpush1.msra.mxu0 0.0
    %709 = vmatprep.subr.mxu0 0.0
    %710 = vmatpush1.msra.mxu0 0.0
    %711 = vmatprep.subr.mxu0 0.0
    %712 = vmatpush1.msra.mxu0 0.0
    %713 = vmatprep.subr.mxu0 0.0
    %714 = vmatpush1.msra.mxu0 0.0
    %715 = vmatprep.subr.mxu0 0.0
    %716 = vmatpush1.msra.mxu0 0.0
    %717 = vmatprep.subr.mxu0 0.0
    %718 = vmatpush1.msra.mxu0 0.0
    %719 = vmatprep.subr.mxu0 0.0
    %720 = vmatpush1.msra.mxu0 0.0
    %721 = vmatprep.subr.mxu0 0.0
    %722 = vmatpush1.msra.mxu0 0.0
    %723 = vmatprep.subr.mxu0 0.0
    %724 = vmatpush1.msra.mxu0 0.0
    %725 = vmatprep.subr.mxu0 0.0
    %726 = vmatpush1.msra.mxu0 0.0
    %727 = vmatprep.mubr.f32.mxu0 0.0
    %728 = vmatmul.mubr.f32.gmra.mrb[0].mxu0 %v120
    %v729 = vpop.f32.mrb[0].mxu0
    %v730 = vadd.f32 %v101, %v729
    %v731 = vpop.f32.mrb[0].mxu0
    %v732 = vadd.f32 %v101, %v731
    %733 = vmatprep.mubr.f32.mxu0 0.0
    %734 = vmatmul.mubr.f32.gmra.mrb[0].mxu0 %v123
    %v735 = vpop.f32.mrb[0].mxu0
    %v736 = vadd.f32 %v106, %v735
    %v737 = vpop.f32.mrb[0].mxu0
    %v738 = vadd.f32 %v106, %v737
    %739 = vmatprep.mubr.f32.mxu0 0.0
    %740 = vmatmul.mubr.f32.gmra.mrb[0].mxu0 %v126
    %v741 = vpop.f32.mrb[0].mxu0
    %v742 = vadd.f32 %v111, %v741
    %v743 = vpop.f32.mrb[0].mxu0
    %v744 = vadd.f32 %v111, %v743
    %745 = vmatprep.mubr.f32.mxu0 0.0
    %746 = vmatmul.mubr.f32.gmra.mrb[0].mxu0 %v129
    %v747 = vpop.f32.mrb[0].mxu0
    %v748 = vadd.f32 %v116, %v747
    %v749 = vpop.f32.mrb[0].mxu0
    %v750 = vadd.f32 %v116, %v749
    %751 = vdwg.mxu0
    %v752 = vmax.f32 %v730, 0.0
    %v753 = vmax.f32 %v732, 0.0
    %v754 = vmax.f32 %v736, 0.0
    %v755 = vmax.f32 %v738, 0.0
    %v756 = vmax.f32 %v742, 0.0
    %v757 = vmax.f32 %v744, 0.0
    %v758 = vmax.f32 %v748, 0.0
    %v759 = vmax.f32 %v750, 0.0
    %760 = vmatprep.subr.mxu0 %v753
    %761 = vmatpush1.msra.mxu0 %v752
    %762 = vmatprep.subr.mxu0 %v755
    %763 = vmatpush1.msra.mxu0 %v754
    %764 = vmatprep.subr.mxu0 %v757
    %765 = vmatpush1.msra.mxu0 %v756
    %766 = vmatprep.subr.mxu0 %v759
    %767 = vmatpush1.msra.mxu0 %v758
    %768 = vmatprep.subr.mxu0 0.0
    %769 = vmatpush1.msra.mxu0 0.0
    %770 = vmatprep.subr.mxu0 0.0
    %771 = vmatpush1.msra.mxu0 0.0
    %772 = vmatprep.subr.mxu0 0.0
    %773 = vmatpush1.msra.mxu0 0.0
    %774 = vmatprep.subr.mxu0 0.0
    %775 = vmatpush1.msra.mxu0 0.0
    %776 = vmatprep.subr.mxu0 0.0
    %777 = vmatpush1.msra.mxu0 0.0
    %778 = vmatprep.subr.mxu0 0.0
    %779 = vmatpush1.msra.mxu0 0.0
    %780 = vmatprep.subr.mxu0 0.0
    %781 = vmatpush1.msra.mxu0 0.0
    %782 = vmatprep.subr.mxu0 0.0
    %783 = vmatpush1.msra.mxu0 0.0
    %784 = vmatprep.subr.mxu0 0.0
    %785 = vmatpush1.msra.mxu0 0.0
    %786 = vmatprep.subr.mxu0 0.0
    %787 = vmatpush1.msra.mxu0 0.0
    %788 = vmatprep.subr.mxu0 0.0
    %789 = vmatpush1.msra.mxu0 0.0
    %790 = vmatprep.subr.mxu0 0.0
    %791 = vmatpush1.msra.mxu0 0.0
    %792 = vmatprep.subr.mxu0 0.0
    %793 = vmatpush1.msra.mxu0 0.0
    %794 = vmatprep.subr.mxu0 0.0
    %795 = vmatpush1.msra.mxu0 0.0
    %796 = vmatprep.subr.mxu0 0.0
    %797 = vmatpush1.msra.mxu0 0.0
    %798 = vmatprep.subr.mxu0 0.0
    %799 = vmatpush1.msra.mxu0 0.0
    %800 = vmatprep.subr.mxu0 0.0
    %801 = vmatpush1.msra.mxu0 0.0
    %802 = vmatprep.subr.mxu0 0.0
    %803 = vmatpush1.msra.mxu0 0.0
    %804 = vmatprep.subr.mxu0 0.0
    %805 = vmatpush1.msra.mxu0 0.0
    %806 = vmatprep.subr.mxu0 0.0
    %807 = vmatpush1.msra.mxu0 0.0
    %808 = vmatprep.subr.mxu0 0.0
    %809 = vmatpush1.msra.mxu0 0.0
    %810 = vmatprep.subr.mxu0 0.0
    %811 = vmatpush1.msra.mxu0 0.0
    %812 = vmatprep.subr.mxu0 0.0
    %813 = vmatpush1.msra.mxu0 0.0
    %814 = vmatprep.subr.mxu0 0.0
    %815 = vmatpush1.msra.mxu0 0.0
    %816 = vmatprep.subr.mxu0 0.0
    %817 = vmatpush1.msra.mxu0 0.0
    %818 = vmatprep.subr.mxu0 0.0
    %819 = vmatpush1.msra.mxu0 0.0
    %820 = vmatprep.subr.mxu0 0.0
    %821 = vmatpush1.msra.mxu0 0.0
    %822 = vmatprep.subr.mxu0 0.0
    %823 = vmatpush1.msra.mxu0 0.0
    %824 = vmatprep.mubr.f32.mxu0 0.0
    %825 = vmatmul.mubr.f32.gmra.mrb[0].mxu0 %v249
    %v826 = vpop.f32.mrb[0].mxu0
    %v827 = vadd.f32 %v231, %v826
    %v828 = vpop.f32.mrb[0].mxu0
    %v829 = vadd.f32 %v231, %v828
    %830 = vmatprep.mubr.f32.mxu0 0.0
    %831 = vmatmul.mubr.f32.gmra.mrb[0].mxu0 %v252
    %v832 = vpop.f32.mrb[0].mxu0
    %v833 = vadd.f32 %v236, %v832
    %v834 = vpop.f32.mrb[0].mxu0
    %v835 = vadd.f32 %v236, %v834
    %836 = vmatprep.mubr.f32.mxu0 0.0
    %837 = vmatmul.mubr.f32.gmra.mrb[0].mxu0 %v255
    %v838 = vpop.f32.mrb[0].mxu0
    %v839 = vadd.f32 %v241, %v838
    %v840 = vpop.f32.mrb[0].mxu0
    %v841 = vadd.f32 %v241, %v840
    %842 = vmatprep.mubr.f32.mxu0 0.0
    %843 = vmatmul.mubr.f32.gmra.mrb[0].mxu0 %v258
    %v844 = vpop.f32.mrb[0].mxu0
    %v845 = vadd.f32 %v246, %v844
    %v846 = vpop.f32.mrb[0].mxu0
    %v847 = vadd.f32 %v246, %v846
    %848 = vdwg.mxu0
    %v849 = vmax.f32 %v827, 0.0
    %v850 = vmax.f32 %v829, 0.0
    %v851 = vmax.f32 %v833, 0.0
    %v852 = vmax.f32 %v835, 0.0
    %v853 = vmax.f32 %v839, 0.0
    %v854 = vmax.f32 %v841, 0.0
    %v855 = vmax.f32 %v845, 0.0
    %v856 = vmax.f32 %v847, 0.0
    %s857 = scalar_lea.vmem [#allocation3], 64
    %858 = vst [vmem:[%s857] sm:$0xff] %v849
    %859 = vst [vmem:[%s857 + $0x8] sm:$0xff] %v850
    %860 = vst [vmem:[%s857 + $0x10] sm:$0xff] %v851
    %861 = vst [vmem:[%s857 + $0x18] sm:$0xff] %v852
    %862 = vst [vmem:[%s857 + $0x20] sm:$0xff] %v853
    %863 = vst [vmem:[%s857 + $0x28] sm:$0xff] %v854
    %864 = vst [vmem:[%s857 + $0x30] sm:$0xff] %v855
    %865 = vst [vmem:[%s857 + $0x38] sm:$0xff] %v856
    %866 = vmatprep.subr.mxu0 %v850
    %867 = vmatpush1.msra.mxu0 %v849
    %868 = vmatprep.subr.mxu0 %v852
    %869 = vmatpush1.msra.mxu0 %v851
    %870 = vmatprep.subr.mxu0 %v854
    %871 = vmatpush1.msra.mxu0 %v853
    %872 = vmatprep.subr.mxu0 %v856
    %873 = vmatpush1.msra.mxu0 %v855
    %874 = vmatprep.subr.mxu0 0.0
    %875 = vmatpush1.msra.mxu0 0.0
    %876 = vmatprep.subr.mxu0 0.0
    %877 = vmatpush1.msra.mxu0 0.0
    %878 = vmatprep.subr.mxu0 0.0
    %879 = vmatpush1.msra.mxu0 0.0
    %880 = vmatprep.subr.mxu0 0.0
    %881 = vmatpush1.msra.mxu0 0.0
    %882 = vmatprep.subr.mxu0 0.0
    %883 = vmatpush1.msra.mxu0 0.0
    %884 = vmatprep.subr.mxu0 0.0
    %885 = vmatpush1.msra.mxu0 0.0
    %886 = vmatprep.subr.mxu0 0.0
    %887 = vmatpush1.msra.mxu0 0.0
    %888 = vmatprep.subr.mxu0 0.0
    %889 = vmatpush1.msra.mxu0 0.0
    %890 = vmatprep.subr.mxu0 0.0
    %891 = vmatpush1.msra.mxu0 0.0
    %892 = vmatprep.subr.mxu0 0.0
    %893 = vmatpush1.msra.mxu0 0.0
    %894 = vmatprep.subr.mxu0 0.0
    %895 = vmatpush1.msra.mxu0 0.0
    %896 = vmatprep.subr.mxu0 0.0
    %897 = vmatpush1.msra.mxu0 0.0
    %898 = vmatprep.subr.mxu0 0.0
    %899 = vmatpush1.msra.mxu0 0.0
    %900 = vmatprep.subr.mxu0 0.0
    %901 = vmatpush1.msra.mxu0 0.0
    %902 = vmatprep.subr.mxu0 0.0
    %903 = vmatpush1.msra.mxu0 0.0
    %904 = vmatprep.subr.mxu0 0.0
    %905 = vmatpush1.msra.mxu0 0.0
    %906 = vmatprep.subr.mxu0 0.0
    %907 = vmatpush1.msra.mxu0 0.0
    %908 = vmatprep.subr.mxu0 0.0
    %909 = vmatpush1.msra.mxu0 0.0
    %910 = vmatprep.subr.mxu0 0.0
    %911 = vmatpush1.msra.mxu0 0.0
    %912 = vmatprep.subr.mxu0 0.0
    %913 = vmatpush1.msra.mxu0 0.0
    %914 = vmatprep.subr.mxu0 0.0
    %915 = vmatpush1.msra.mxu0 0.0
    %916 = vmatprep.subr.mxu0 0.0
    %917 = vmatpush1.msra.mxu0 0.0
    %918 = vmatprep.subr.mxu0 0.0
    %919 = vmatpush1.msra.mxu0 0.0
    %920 = vmatprep.subr.mxu0 0.0
    %921 = vmatpush1.msra.mxu0 0.0
    %922 = vmatprep.subr.mxu0 0.0
    %923 = vmatpush1.msra.mxu0 0.0
    %924 = vmatprep.subr.mxu0 0.0
    %925 = vmatpush1.msra.mxu0 0.0
    %926 = vmatprep.subr.mxu0 0.0
    %927 = vmatpush1.msra.mxu0 0.0
    %928 = vmatprep.subr.mxu0 0.0
    %929 = vmatpush1.msra.mxu0 0.0
    %930 = vmatprep.mubr.f32.mxu0 0.0
    %931 = vmatmul.mubr.f32.gmra.mrb[0].mxu0 %v406
    %v932 = vpop.f32.mrb[0].mxu0
    %v933 = vadd.f32 %v368, %v932
    %v934 = vpop.f32.mrb[0].mxu0
    %v935 = vadd.f32 %v368, %v934
    %936 = vmatprep.mubr.f32.mxu0 0.0
    %937 = vmatmul.mubr.f32.gmra.mrb[0].mxu0 %v409
    %v938 = vpop.f32.mrb[0].mxu0
    %v939 = vadd.f32 %v373, %v938
    %v940 = vpop.f32.mrb[0].mxu0
    %v941 = vadd.f32 %v373, %v940
    %942 = vmatprep.mubr.f32.mxu0 0.0
    %943 = vmatmul.mubr.f32.gmra.mrb[0].mxu0 %v412
    %v944 = vpop.f32.mrb[0].mxu0
    %v945 = vadd.f32 %v378, %v944
    %v946 = vpop.f32.mrb[0].mxu0
    %v947 = vadd.f32 %v378, %v946
    %948 = vmatprep.mubr.f32.mxu0 0.0
    %949 = vmatmul.mubr.f32.gmra.mrb[0].mxu0 %v415
    %v950 = vpop.f32.mrb[0].mxu0
    %v951 = vadd.f32 %v383, %v950
    %v952 = vpop.f32.mrb[0].mxu0
    %v953 = vadd.f32 %v383, %v952
    %954 = vmatprep.mubr.f32.mxu0 0.0
    %955 = vmatmul.mubr.f32.gmra.mrb[0].mxu0 %v418
    %v956 = vpop.f32.mrb[0].mxu0
    %v957 = vadd.f32 %v388, %v956
    %v958 = vpop.f32.mrb[0].mxu0
    %v959 = vadd.f32 %v388, %v958
    %960 = vmatprep.mubr.f32.mxu0 0.0
    %961 = vmatmul.mubr.f32.gmra.mrb[0].mxu0 %v421
    %v962 = vpop.f32.mrb[0].mxu0
    %v963 = vadd.f32 %v393, %v962
    %v964 = vpop.f32.mrb[0].mxu0
    %v965 = vadd.f32 %v393, %v964
    %966 = vmatprep.mubr.f32.mxu0 0.0
    %967 = vmatmul.mubr.f32.gmra.mrb[0].mxu0 %v424
    %v968 = vpop.f32.mrb[0].mxu0
    %v969 = vadd.f32 %v398, %v968
    %v970 = vpop.f32.mrb[0].mxu0
    %v971 = vadd.f32 %v398, %v970
    %972 = vmatprep.mubr.f32.mxu0 0.0
    %973 = vmatmul.mubr.f32.gmra.mrb[0].mxu0 %v427
    %v974 = vpop.f32.mrb[0].mxu0
    %v975 = vadd.f32 %v403, %v974
    %v976 = vpop.f32.mrb[0].mxu0
    %v977 = vadd.f32 %v403, %v976
    %978 = vdwg.mxu0
    %v979 = vmax.f32 %v933, 0.0
    %v980 = vmax.f32 %v935, 0.0
    %v981 = vmax.f32 %v939, 0.0
    %v982 = vmax.f32 %v941, 0.0
    %v983 = vmax.f32 %v945, 0.0
    %v984 = vmax.f32 %v947, 0.0
    %v985 = vmax.f32 %v951, 0.0
    %v986 = vmax.f32 %v953, 0.0
    %v987 = vmax.f32 %v957, 0.0
    %v988 = vmax.f32 %v959, 0.0
    %v989 = vmax.f32 %v963, 0.0
    %v990 = vmax.f32 %v965, 0.0
    %v991 = vmax.f32 %v969, 0.0
    %v992 = vmax.f32 %v971, 0.0
    %v993 = vmax.f32 %v975, 0.0
    %v994 = vmax.f32 %v977, 0.0
    %995 = vmatprep.subr.mxu0 %v980
    %996 = vmatpush1.msra.mxu0 %v979
    %997 = vmatprep.subr.mxu0 %v982
    %998 = vmatpush1.msra.mxu0 %v981
    %999 = vmatprep.subr.mxu0 %v984
    %1000 = vmatpush1.msra.mxu0 %v983
    %1001 = vmatprep.subr.mxu0 %v986
    %1002 = vmatpush1.msra.mxu0 %v985
    %1003 = vmatprep.subr.mxu0 %v988
    %1004 = vmatpush1.msra.mxu0 %v987
    %1005 = vmatprep.subr.mxu0 %v990
    %1006 = vmatpush1.msra.mxu0 %v989
    %1007 = vmatprep.subr.mxu0 %v992
    %1008 = vmatpush1.msra.mxu0 %v991
    %1009 = vmatprep.subr.mxu0 %v994
    %1010 = vmatpush1.msra.mxu0 %v993
    %1011 = vmatprep.subr.mxu0 0.0
    %1012 = vmatpush1.msra.mxu0 0.0
    %1013 = vmatprep.subr.mxu0 0.0
    %1014 = vmatpush1.msra.mxu0 0.0
    %1015 = vmatprep.subr.mxu0 0.0
    %1016 = vmatpush1.msra.mxu0 0.0
    %1017 = vmatprep.subr.mxu0 0.0
    %1018 = vmatpush1.msra.mxu0 0.0
    %1019 = vmatprep.subr.mxu0 0.0
    %1020 = vmatpush1.msra.mxu0 0.0
    %1021 = vmatprep.subr.mxu0 0.0
    %1022 = vmatpush1.msra.mxu0 0.0
    %1023 = vmatprep.subr.mxu0 0.0
    %1024 = vmatpush1.msra.mxu0 0.0
    %1025 = vmatprep.subr.mxu0 0.0
    %1026 = vmatpush1.msra.mxu0 0.0
    %1027 = vmatprep.subr.mxu0 0.0
    %1028 = vmatpush1.msra.mxu0 0.0
    %1029 = vmatprep.subr.mxu0 0.0
    %1030 = vmatpush1.msra.mxu0 0.0
    %1031 = vmatprep.subr.mxu0 0.0
    %1032 = vmatpush1.msra.mxu0 0.0
    %1033 = vmatprep.subr.mxu0 0.0
    %1034 = vmatpush1.msra.mxu0 0.0
    %1035 = vmatprep.subr.mxu0 0.0
    %1036 = vmatpush1.msra.mxu0 0.0
    %1037 = vmatprep.subr.mxu0 0.0
    %1038 = vmatpush1.msra.mxu0 0.0
    %1039 = vmatprep.subr.mxu0 0.0
    %1040 = vmatpush1.msra.mxu0 0.0
    %1041 = vmatprep.subr.mxu0 0.0
    %1042 = vmatpush1.msra.mxu0 0.0
    %1043 = vmatprep.subr.mxu0 0.0
    %1044 = vmatpush1.msra.mxu0 0.0
    %1045 = vmatprep.subr.mxu0 0.0
    %1046 = vmatpush1.msra.mxu0 0.0
    %1047 = vmatprep.subr.mxu0 0.0
    %1048 = vmatpush1.msra.mxu0 0.0
    %1049 = vmatprep.subr.mxu0 0.0
    %1050 = vmatpush1.msra.mxu0 0.0
    %1051 = vmatprep.subr.mxu0 0.0
    %1052 = vmatpush1.msra.mxu0 0.0
    %1053 = vmatprep.subr.mxu0 0.0
    %1054 = vmatpush1.msra.mxu0 0.0
    %1055 = vmatprep.subr.mxu0 0.0
    %1056 = vmatpush1.msra.mxu0 0.0
    %1057 = vmatprep.subr.mxu0 0.0
    %1058 = vmatpush1.msra.mxu0 0.0
    %1059 = vmatprep.mubr.f32.mxu0 0.0
    %1060 = vmatmul.mubr.f32.gmra.mrb[0].mxu0 %v569
    %v1061 = vpop.f32.mrb[0].mxu0
    %v1062 = vadd.f32 %v566, %v1061
    %v1063 = vpop.f32.mrb[0].mxu0
    %v1064 = vadd.f32 %v566, %v1063
    %1065 = vdwg.mxu0
    %v1066 = vsub.f32 0.0, %v1062
    %v1067 = vsub.f32 0.0, %v1064
    %v1068 = vmul.f32 %v1066, 1.442695
    %v1069 = vpow.pop %v1068
    %v1070 = vmul.f32 %v1067, 1.442695
    %v1071 = vpow.pop %v1070
    %v1072 = vadd.f32 %v1069, 1.0
    %v1073 = vadd.f32 %v1071, 1.0
    %v1074 = vrcp.pop %v1072
    %v1075 = vmul.f32 1.0, %v1074
    %v1076 = vrcp.pop %v1073
    %v1077 = vmul.f32 1.0, %v1076
    %s1078 = scalar_lea.vmem %s0, 128
    %v1079 = vld [vmem:[%s1078] sm:$0xff]
    %v1080 = vld [vmem:[%s1078 + $0x8] sm:$0xff]
    %v1081 = vld [vmem:[%s1078 + $0x10] sm:$0xff]
    %v1082 = vld [vmem:[%s1078 + $0x18] sm:$0xff]
    %v1083 = vld [vmem:[%s1078 + $0x20] sm:$0xff]
    %v1084 = vld [vmem:[%s1078 + $0x28] sm:$0xff]
    %v1085 = vld [vmem:[%s1078 + $0x30] sm:$0xff]
    %v1086 = vld [vmem:[%s1078 + $0x38] sm:$0xff]
    %1087 = vmatprep.subr.mxu0 %v1080
    %1088 = vmatpush1.msra.mxu0 %v1079
    %1089 = vmatprep.subr.mxu0 %v1082
    %1090 = vmatpush1.msra.mxu0 %v1081
    %1091 = vmatprep.subr.mxu0 %v1084
    %1092 = vmatpush1.msra.mxu0 %v1083
    %1093 = vmatprep.subr.mxu0 %v1086
    %1094 = vmatpush1.msra.mxu0 %v1085
    %1095 = vmatprep.subr.mxu0 0.0
    %1096 = vmatpush1.msra.mxu0 0.0
    %1097 = vmatprep.subr.mxu0 0.0
    %1098 = vmatpush1.msra.mxu0 0.0
    %1099 = vmatprep.subr.mxu0 0.0
    %1100 = vmatpush1.msra.mxu0 0.0
    %1101 = vmatprep.subr.mxu0 0.0
    %1102 = vmatpush1.msra.mxu0 0.0
    %1103 = vmatprep.subr.mxu0 0.0
    %1104 = vmatpush1.msra.mxu0 0.0
    %1105 = vmatprep.subr.mxu0 0.0
    %1106 = vmatpush1.msra.mxu0 0.0
    %1107 = vmatprep.subr.mxu0 0.0
    %1108 = vmatpush1.msra.mxu0 0.0
    %1109 = vmatprep.subr.mxu0 0.0
    %1110 = vmatpush1.msra.mxu0 0.0
    %1111 = vmatprep.subr.mxu0 0.0
    %1112 = vmatpush1.msra.mxu0 0.0
    %1113 = vmatprep.subr.mxu0 0.0
    %1114 = vmatpush1.msra.mxu0 0.0
    %1115 = vmatprep.subr.mxu0 0.0
    %1116 = vmatpush1.msra.mxu0 0.0
    %1117 = vmatprep.subr.mxu0 0.0
    %1118 = vmatpush1.msra.mxu0 0.0
    %1119 = vmatprep.subr.mxu0 0.0
    %1120 = vmatpush1.msra.mxu0 0.0
    %1121 = vmatprep.subr.mxu0 0.0
    %1122 = vmatpush1.msra.mxu0 0.0
    %1123 = vmatprep.subr.mxu0 0.0
    %1124 = vmatpush1.msra.mxu0 0.0
    %1125 = vmatprep.subr.mxu0 0.0
    %1126 = vmatpush1.msra.mxu0 0.0
    %1127 = vmatprep.subr.mxu0 0.0
    %1128 = vmatpush1.msra.mxu0 0.0
    %1129 = vmatprep.subr.mxu0 0.0
    %1130 = vmatpush1.msra.mxu0 0.0
    %1131 = vmatprep.subr.mxu0 0.0
    %1132 = vmatpush1.msra.mxu0 0.0
    %1133 = vmatprep.subr.mxu0 0.0
    %1134 = vmatpush1.msra.mxu0 0.0
    %1135 = vmatprep.subr.mxu0 0.0
    %1136 = vmatpush1.msra.mxu0 0.0
    %1137 = vmatprep.subr.mxu0 0.0
    %1138 = vmatpush1.msra.mxu0 0.0
    %1139 = vmatprep.subr.mxu0 0.0
    %1140 = vmatpush1.msra.mxu0 0.0
    %1141 = vmatprep.subr.mxu0 0.0
    %1142 = vmatpush1.msra.mxu0 0.0
    %1143 = vmatprep.subr.mxu0 0.0
    %1144 = vmatpush1.msra.mxu0 0.0
    %1145 = vmatprep.subr.mxu0 0.0
    %1146 = vmatpush1.msra.mxu0 0.0
    %1147 = vmatprep.subr.mxu0 0.0
    %1148 = vmatpush1.msra.mxu0 0.0
    %1149 = vmatprep.subr.mxu0 0.0
    %1150 = vmatpush1.msra.mxu0 0.0
    %1151 = vmatprep.mubr.f32.mxu0 0.0
    %1152 = vmatmul.mubr.f32.gmra.mrb[0].mxu0 %v120
    %v1153 = vpop.f32.mrb[0].mxu0
    %v1154 = vadd.f32 %v101, %v1153
    %v1155 = vpop.f32.mrb[0].mxu0
    %v1156 = vadd.f32 %v101, %v1155
    %1157 = vmatprep.mubr.f32.mxu0 0.0
    %1158 = vmatmul.mubr.f32.gmra.mrb[0].mxu0 %v123
    %v1159 = vpop.f32.mrb[0].mxu0
    %v1160 = vadd.f32 %v106, %v1159
    %v1161 = vpop.f32.mrb[0].mxu0
    %v1162 = vadd.f32 %v106, %v1161
    %1163 = vmatprep.mubr.f32.mxu0 0.0
    %1164 = vmatmul.mubr.f32.gmra.mrb[0].mxu0 %v126
    %v1165 = vpop.f32.mrb[0].mxu0
    %v1166 = vadd.f32 %v111, %v1165
    %v1167 = vpop.f32.mrb[0].mxu0
    %v1168 = vadd.f32 %v111, %v1167
    %1169 = vmatprep.mubr.f32.mxu0 0.0
    %1170 = vmatmul.mubr.f32.gmra.mrb[0].mxu0 %v129
    %v1171 = vpop.f32.mrb[0].mxu0
    %v1172 = vadd.f32 %v116, %v1171
    %v1173 = vpop.f32.mrb[0].mxu0
    %v1174 = vadd.f32 %v116, %v1173
    %1175 = vdwg.mxu0
    %v1176 = vmax.f32 %v1154, 0.0
    %v1177 = vmax.f32 %v1156, 0.0
    %v1178 = vmax.f32 %v1160, 0.0
    %v1179 = vmax.f32 %v1162, 0.0
    %v1180 = vmax.f32 %v1166, 0.0
    %v1181 = vmax.f32 %v1168, 0.0
    %v1182 = vmax.f32 %v1172, 0.0
    %v1183 = vmax.f32 %v1174, 0.0
    %1184 = vmatprep.subr.mxu0 %v1177
    %1185 = vmatpush1.msra.mxu0 %v1176
    %1186 = vmatprep.subr.mxu0 %v1179
    %1187 = vmatpush1.msra.mxu0 %v1178
    %1188 = vmatprep.subr.mxu0 %v1181
    %1189 = vmatpush1.msra.mxu0 %v1180
    %1190 = vmatprep.subr.mxu0 %v1183
    %1191 = vmatpush1.msra.mxu0 %v1182
    %1192 = vmatprep.subr.mxu0 0.0
    %1193 = vmatpush1.msra.mxu0 0.0
    %1194 = vmatprep.subr.mxu0 0.0
    %1195 = vmatpush1.msra.mxu0 0.0
    %1196 = vmatprep.subr.mxu0 0.0
    %1197 = vmatpush1.msra.mxu0 0.0
    %1198 = vmatprep.subr.mxu0 0.0
    %1199 = vmatpush1.msra.mxu0 0.0
    %1200 = vmatprep.subr.mxu0 0.0
    %1201 = vmatpush1.msra.mxu0 0.0
    %1202 = vmatprep.subr.mxu0 0.0
    %1203 = vmatpush1.msra.mxu0 0.0
    %1204 = vmatprep.subr.mxu0 0.0
    %1205 = vmatpush1.msra.mxu0 0.0
    %1206 = vmatprep.subr.mxu0 0.0
    %1207 = vmatpush1.msra.mxu0 0.0
    %1208 = vmatprep.subr.mxu0 0.0
    %1209 = vmatpush1.msra.mxu0 0.0
    %1210 = vmatprep.subr.mxu0 0.0
    %1211 = vmatpush1.msra.mxu0 0.0
    %1212 = vmatprep.subr.mxu0 0.0
    %1213 = vmatpush1.msra.mxu0 0.0
    %1214 = vmatprep.subr.mxu0 0.0
    %1215 = vmatpush1.msra.mxu0 0.0
    %1216 = vmatprep.subr.mxu0 0.0
    %1217 = vmatpush1.msra.mxu0 0.0
    %1218 = vmatprep.subr.mxu0 0.0
    %1219 = vmatpush1.msra.mxu0 0.0
    %1220 = vmatprep.subr.mxu0 0.0
    %1221 = vmatpush1.msra.mxu0 0.0
    %1222 = vmatprep.subr.mxu0 0.0
    %1223 = vmatpush1.msra.mxu0 0.0
    %1224 = vmatprep.subr.mxu0 0.0
    %1225 = vmatpush1.msra.mxu0 0.0
    %1226 = vmatprep.subr.mxu0 0.0
    %1227 = vmatpush1.msra.mxu0 0.0
    %1228 = vmatprep.subr.mxu0 0.0
    %1229 = vmatpush1.msra.mxu0 0.0
    %1230 = vmatprep.subr.mxu0 0.0
    %1231 = vmatpush1.msra.mxu0 0.0
    %1232 = vmatprep.subr.mxu0 0.0
    %1233 = vmatpush1.msra.mxu0 0.0
    %1234 = vmatprep.subr.mxu0 0.0
    %1235 = vmatpush1.msra.mxu0 0.0
    %1236 = vmatprep.subr.mxu0 0.0
    %1237 = vmatpush1.msra.mxu0 0.0
    %1238 = vmatprep.subr.mxu0 0.0
    %1239 = vmatpush1.msra.mxu0 0.0
    %1240 = vmatprep.subr.mxu0 0.0
    %1241 = vmatpush1.msra.mxu0 0.0
    %1242 = vmatprep.subr.mxu0 0.0
    %1243 = vmatpush1.msra.mxu0 0.0
    %1244 = vmatprep.subr.mxu0 0.0
    %1245 = vmatpush1.msra.mxu0 0.0
    %1246 = vmatprep.subr.mxu0 0.0
    %1247 = vmatpush1.msra.mxu0 0.0
    %1248 = vmatprep.mubr.f32.mxu0 0.0
    %1249 = vmatmul.mubr.f32.gmra.mrb[0].mxu0 %v249
    %v1250 = vpop.f32.mrb[0].mxu0
    %v1251 = vadd.f32 %v231, %v1250
    %v1252 = vpop.f32.mrb[0].mxu0
    %v1253 = vadd.f32 %v231, %v1252
    %1254 = vmatprep.mubr.f32.mxu0 0.0
    %1255 = vmatmul.mubr.f32.gmra.mrb[0].mxu0 %v252
    %v1256 = vpop.f32.mrb[0].mxu0
    %v1257 = vadd.f32 %v236, %v1256
    %v1258 = vpop.f32.mrb[0].mxu0
    %v1259 = vadd.f32 %v236, %v1258
    %1260 = vmatprep.mubr.f32.mxu0 0.0
    %1261 = vmatmul.mubr.f32.gmra.mrb[0].mxu0 %v255
    %v1262 = vpop.f32.mrb[0].mxu0
    %v1263 = vadd.f32 %v241, %v1262
    %v1264 = vpop.f32.mrb[0].mxu0
    %v1265 = vadd.f32 %v241, %v1264
    %1266 = vmatprep.mubr.f32.mxu0 0.0
    %1267 = vmatmul.mubr.f32.gmra.mrb[0].mxu0 %v258
    %v1268 = vpop.f32.mrb[0].mxu0
    %v1269 = vadd.f32 %v246, %v1268
    %v1270 = vpop.f32.mrb[0].mxu0
    %v1271 = vadd.f32 %v246, %v1270
    %1272 = vdwg.mxu0
    %v1273 = vmax.f32 %v1251, 0.0
    %v1274 = vmax.f32 %v1253, 0.0
    %v1275 = vmax.f32 %v1257, 0.0
    %v1276 = vmax.f32 %v1259, 0.0
    %v1277 = vmax.f32 %v1263, 0.0
    %v1278 = vmax.f32 %v1265, 0.0
    %v1279 = vmax.f32 %v1269, 0.0
    %v1280 = vmax.f32 %v1271, 0.0
    %s1281 = scalar_lea.vmem [#allocation3], 128
    %1282 = vst [vmem:[%s1281] sm:$0xff] %v1273
    %1283 = vst [vmem:[%s1281 + $0x8] sm:$0xff] %v1274
    %1284 = vst [vmem:[%s1281 + $0x10] sm:$0xff] %v1275
    %1285 = vst [vmem:[%s1281 + $0x18] sm:$0xff] %v1276
    %1286 = vst [vmem:[%s1281 + $0x20] sm:$0xff] %v1277
    %1287 = vst [vmem:[%s1281 + $0x28] sm:$0xff] %v1278
    %1288 = vst [vmem:[%s1281 + $0x30] sm:$0xff] %v1279
    %1289 = vst [vmem:[%s1281 + $0x38] sm:$0xff] %v1280
    %1290 = vmatprep.subr.mxu0 %v1274
    %1291 = vmatpush1.msra.mxu0 %v1273
    %1292 = vmatprep.subr.mxu0 %v1276
    %1293 = vmatpush1.msra.mxu0 %v1275
    %1294 = vmatprep.subr.mxu0 %v1278
    %1295 = vmatpush1.msra.mxu0 %v1277
    %1296 = vmatprep.subr.mxu0 %v1280
    %1297 = vmatpush1.msra.mxu0 %v1279
    %1298 = vmatprep.subr.mxu0 0.0
    %1299 = vmatpush1.msra.mxu0 0.0
    %1300 = vmatprep.subr.mxu0 0.0
    %1301 = vmatpush1.msra.mxu0 0.0
    %1302 = vmatprep.subr.mxu0 0.0
    %1303 = vmatpush1.msra.mxu0 0.0
    %1304 = vmatprep.subr.mxu0 0.0
    %1305 = vmatpush1.msra.mxu0 0.0
    %1306 = vmatprep.subr.mxu0 0.0
    %1307 = vmatpush1.msra.mxu0 0.0
    %1308 = vmatprep.subr.mxu0 0.0
    %1309 = vmatpush1.msra.mxu0 0.0
    %1310 = vmatprep.subr.mxu0 0.0
    %1311 = vmatpush1.msra.mxu0 0.0
    %1312 = vmatprep.subr.mxu0 0.0
    %1313 = vmatpush1.msra.mxu0 0.0
    %1314 = vmatprep.subr.mxu0 0.0
    %1315 = vmatpush1.msra.mxu0 0.0
    %1316 = vmatprep.subr.mxu0 0.0
    %1317 = vmatpush1.msra.mxu0 0.0
    %1318 = vmatprep.subr.mxu0 0.0
    %1319 = vmatpush1.msra.mxu0 0.0
    %1320 = vmatprep.subr.mxu0 0.0
    %1321 = vmatpush1.msra.mxu0 0.0
    %1322 = vmatprep.subr.mxu0 0.0
    %1323 = vmatpush1.msra.mxu0 0.0
    %1324 = vmatprep.subr.mxu0 0.0
    %1325 = vmatpush1.msra.mxu0 0.0
    %1326 = vmatprep.subr.mxu0 0.0
    %1327 = vmatpush1.msra.mxu0 0.0
    %1328 = vmatprep.subr.mxu0 0.0
    %1329 = vmatpush1.msra.mxu0 0.0
    %1330 = vmatprep.subr.mxu0 0.0
    %1331 = vmatpush1.msra.mxu0 0.0
    %1332 = vmatprep.subr.mxu0 0.0
    %1333 = vmatpush1.msra.mxu0 0.0
    %1334 = vmatprep.subr.mxu0 0.0
    %1335 = vmatpush1.msra.mxu0 0.0
    %1336 = vmatprep.subr.mxu0 0.0
    %1337 = vmatpush1.msra.mxu0 0.0
    %1338 = vmatprep.subr.mxu0 0.0
    %1339 = vmatpush1.msra.mxu0 0.0
    %1340 = vmatprep.subr.mxu0 0.0
    %1341 = vmatpush1.msra.mxu0 0.0
    %1342 = vmatprep.subr.mxu0 0.0
    %1343 = vmatpush1.msra.mxu0 0.0
    %1344 = vmatprep.subr.mxu0 0.0
    %1345 = vmatpush1.msra.mxu0 0.0
    %1346 = vmatprep.subr.mxu0 0.0
    %1347 = vmatpush1.msra.mxu0 0.0
    %1348 = vmatprep.subr.mxu0 0.0
    %1349 = vmatpush1.msra.mxu0 0.0
    %1350 = vmatprep.subr.mxu0 0.0
    %1351 = vmatpush1.msra.mxu0 0.0
    %1352 = vmatprep.subr.mxu0 0.0
    %1353 = vmatpush1.msra.mxu0 0.0
    %1354 = vmatprep.mubr.f32.mxu0 0.0
    %1355 = vmatmul.mubr.f32.gmra.mrb[0].mxu0 %v406
    %v1356 = vpop.f32.mrb[0].mxu0
    %v1357 = vadd.f32 %v368, %v1356
    %v1358 = vpop.f32.mrb[0].mxu0
    %v1359 = vadd.f32 %v368, %v1358
    %1360 = vmatprep.mubr.f32.mxu0 0.0
    %1361 = vmatmul.mubr.f32.gmra.mrb[0].mxu0 %v409
    %v1362 = vpop.f32.mrb[0].mxu0
    %v1363 = vadd.f32 %v373, %v1362
    %v1364 = vpop.f32.mrb[0].mxu0
    %v1365 = vadd.f32 %v373, %v1364
    %1366 = vmatprep.mubr.f32.mxu0 0.0
    %1367 = vmatmul.mubr.f32.gmra.mrb[0].mxu0 %v412
    %v1368 = vpop.f32.mrb[0].mxu0
    %v1369 = vadd.f32 %v378, %v1368
    %v1370 = vpop.f32.mrb[0].mxu0
    %v1371 = vadd.f32 %v378, %v1370
    %1372 = vmatprep.mubr.f32.mxu0 0.0
    %1373 = vmatmul.mubr.f32.gmra.mrb[0].mxu0 %v415
    %v1374 = vpop.f32.mrb[0].mxu0
    %v1375 = vadd.f32 %v383, %v1374
    %v1376 = vpop.f32.mrb[0].mxu0
    %v1377 = vadd.f32 %v383, %v1376
    %1378 = vmatprep.mubr.f32.mxu0 0.0
    %1379 = vmatmul.mubr.f32.gmra.mrb[0].mxu0 %v418
    %v1380 = vpop.f32.mrb[0].mxu0
    %v1381 = vadd.f32 %v388, %v1380
    %v1382 = vpop.f32.mrb[0].mxu0
    %v1383 = vadd.f32 %v388, %v1382
    %1384 = vmatprep.mubr.f32.mxu0 0.0
    %1385 = vmatmul.mubr.f32.gmra.mrb[0].mxu0 %v421
    %v1386 = vpop.f32.mrb[0].mxu0
    %v1387 = vadd.f32 %v393, %v1386
    %v1388 = vpop.f32.mrb[0].mxu0
    %v1389 = vadd.f32 %v393, %v1388
    %1390 = vmatprep.mubr.f32.mxu0 0.0
    %1391 = vmatmul.mubr.f32.gmra.mrb[0].mxu0 %v424
    %v1392 = vpop.f32.mrb[0].mxu0
    %v1393 = vadd.f32 %v398, %v1392
    %v1394 = vpop.f32.mrb[0].mxu0
    %v1395 = vadd.f32 %v398, %v1394
    %1396 = vmatprep.mubr.f32.mxu0 0.0
    %1397 = vmatmul.mubr.f32.gmra.mrb[0].mxu0 %v427
    %v1398 = vpop.f32.mrb[0].mxu0
    %v1399 = vadd.f32 %v403, %v1398
    %v1400 = vpop.f32.mrb[0].mxu0
    %v1401 = vadd.f32 %v403, %v1400
    %1402 = vdwg.mxu0
    %v1403 = vmax.f32 %v1357, 0.0
    %v1404 = vmax.f32 %v1359, 0.0
    %v1405 = vmax.f32 %v1363, 0.0
    %v1406 = vmax.f32 %v1365, 0.0
    %v1407 = vmax.f32 %v1369, 0.0
    %v1408 = vmax.f32 %v1371, 0.0
    %v1409 = vmax.f32 %v1375, 0.0
    %v1410 = vmax.f32 %v1377, 0.0
    %v1411 = vmax.f32 %v1381, 0.0
    %v1412 = vmax.f32 %v1383, 0.0
    %v1413 = vmax.f32 %v1387, 0.0
    %v1414 = vmax.f32 %v1389, 0.0
    %v1415 = vmax.f32 %v1393, 0.0
    %v1416 = vmax.f32 %v1395, 0.0
    %v1417 = vmax.f32 %v1399, 0.0
    %v1418 = vmax.f32 %v1401, 0.0
    %1419 = vmatprep.subr.mxu0 %v1404
    %1420 = vmatpush1.msra.mxu0 %v1403
    %1421 = vmatprep.subr.mxu0 %v1406
    %1422 = vmatpush1.msra.mxu0 %v1405
    %1423 = vmatprep.subr.mxu0 %v1408
    %1424 = vmatpush1.msra.mxu0 %v1407
    %1425 = vmatprep.subr.mxu0 %v1410
    %1426 = vmatpush1.msra.mxu0 %v1409
    %1427 = vmatprep.subr.mxu0 %v1412
    %1428 = vmatpush1.msra.mxu0 %v1411
    %1429 = vmatprep.subr.mxu0 %v1414
    %1430 = vmatpush1.msra.mxu0 %v1413
    %1431 = vmatprep.subr.mxu0 %v1416
    %1432 = vmatpush1.msra.mxu0 %v1415
    %1433 = vmatprep.subr.mxu0 %v1418
    %1434 = vmatpush1.msra.mxu0 %v1417
    %1435 = vmatprep.subr.mxu0 0.0
    %1436 = vmatpush1.msra.mxu0 0.0
    %1437 = vmatprep.subr.mxu0 0.0
    %1438 = vmatpush1.msra.mxu0 0.0
    %1439 = vmatprep.subr.mxu0 0.0
    %1440 = vmatpush1.msra.mxu0 0.0
    %1441 = vmatprep.subr.mxu0 0.0
    %1442 = vmatpush1.msra.mxu0 0.0
    %1443 = vmatprep.subr.mxu0 0.0
    %1444 = vmatpush1.msra.mxu0 0.0
    %1445 = vmatprep.subr.mxu0 0.0
    %1446 = vmatpush1.msra.mxu0 0.0
    %1447 = vmatprep.subr.mxu0 0.0
    %1448 = vmatpush1.msra.mxu0 0.0
    %1449 = vmatprep.subr.mxu0 0.0
    %1450 = vmatpush1.msra.mxu0 0.0
    %1451 = vmatprep.subr.mxu0 0.0
    %1452 = vmatpush1.msra.mxu0 0.0
    %1453 = vmatprep.subr.mxu0 0.0
    %1454 = vmatpush1.msra.mxu0 0.0
    %1455 = vmatprep.subr.mxu0 0.0
    %1456 = vmatpush1.msra.mxu0 0.0
    %1457 = vmatprep.subr.mxu0 0.0
    %1458 = vmatpush1.msra.mxu0 0.0
    %1459 = vmatprep.subr.mxu0 0.0
    %1460 = vmatpush1.msra.mxu0 0.0
    %1461 = vmatprep.subr.mxu0 0.0
    %1462 = vmatpush1.msra.mxu0 0.0
    %1463 = vmatprep.subr.mxu0 0.0
    %1464 = vmatpush1.msra.mxu0 0.0
    %1465 = vmatprep.subr.mxu0 0.0
    %1466 = vmatpush1.msra.mxu0 0.0
    %1467 = vmatprep.subr.mxu0 0.0
    %1468 = vmatpush1.msra.mxu0 0.0
    %1469 = vmatprep.subr.mxu0 0.0
    %1470 = vmatpush1.msra.mxu0 0.0
    %1471 = vmatprep.subr.mxu0 0.0
    %1472 = vmatpush1.msra.mxu0 0.0
    %1473 = vmatprep.subr.mxu0 0.0
    %1474 = vmatpush1.msra.mxu0 0.0
    %1475 = vmatprep.subr.mxu0 0.0
    %1476 = vmatpush1.msra.mxu0 0.0
    %1477 = vmatprep.subr.mxu0 0.0
    %1478 = vmatpush1.msra.mxu0 0.0
    %1479 = vmatprep.subr.mxu0 0.0
    %1480 = vmatpush1.msra.mxu0 0.0
    %1481 = vmatprep.subr.mxu0 0.0
    %1482 = vmatpush1.msra.mxu0 0.0
    %1483 = vmatprep.mubr.f32.mxu0 0.0
    %1484 = vmatmul.mubr.f32.gmra.mrb[0].mxu0 %v569
    %v1485 = vpop.f32.mrb[0].mxu0
    %v1486 = vadd.f32 %v566, %v1485
    %v1487 = vpop.f32.mrb[0].mxu0
    %v1488 = vadd.f32 %v566, %v1487
    %1489 = vdwg.mxu0
    %v1490 = vsub.f32 0.0, %v1486
    %v1491 = vsub.f32 0.0, %v1488
    %v1492 = vmul.f32 %v1490, 1.442695
    %v1493 = vpow.pop %v1492
    %v1494 = vmul.f32 %v1491, 1.442695
    %v1495 = vpow.pop %v1494
    %v1496 = vadd.f32 %v1493, 1.0
    %v1497 = vadd.f32 %v1495, 1.0
    %v1498 = vrcp.pop %v1496
    %v1499 = vmul.f32 1.0, %v1498
    %v1500 = vrcp.pop %v1497
    %v1501 = vmul.f32 1.0, %v1500
    %s1502 = scalar_lea.vmem %s0, 192
    %v1503 = vld [vmem:[%s1502] sm:$0xff]
    %v1504 = vld [vmem:[%s1502 + $0x8] sm:$0xff]
    %v1505 = vld [vmem:[%s1502 + $0x10] sm:$0xff]
    %v1506 = vld [vmem:[%s1502 + $0x18] sm:$0xff]
    %v1507 = vld [vmem:[%s1502 + $0x20] sm:$0xff]
    %v1508 = vld [vmem:[%s1502 + $0x28] sm:$0xff]
    %v1509 = vld [vmem:[%s1502 + $0x30] sm:$0xff]
    %v1510 = vld [vmem:[%s1502 + $0x38] sm:$0xff]
    %1511 = vmatprep.subr.mxu0 %v1504
    %1512 = vmatpush1.msra.mxu0 %v1503
    %1513 = vmatprep.subr.mxu0 %v1506
    %1514 = vmatpush1.msra.mxu0 %v1505
    %1515 = vmatprep.subr.mxu0 %v1508
    %1516 = vmatpush1.msra.mxu0 %v1507
    %1517 = vmatprep.subr.mxu0 %v1510
    %1518 = vmatpush1.msra.mxu0 %v1509
    %1519 = vmatprep.subr.mxu0 0.0
    %1520 = vmatpush1.msra.mxu0 0.0
    %1521 = vmatprep.subr.mxu0 0.0
    %1522 = vmatpush1.msra.mxu0 0.0
    %1523 = vmatprep.subr.mxu0 0.0
    %1524 = vmatpush1.msra.mxu0 0.0
    %1525 = vmatprep.subr.mxu0 0.0
    %1526 = vmatpush1.msra.mxu0 0.0
    %1527 = vmatprep.subr.mxu0 0.0
    %1528 = vmatpush1.msra.mxu0 0.0
    %1529 = vmatprep.subr.mxu0 0.0
    %1530 = vmatpush1.msra.mxu0 0.0
    %1531 = vmatprep.subr.mxu0 0.0
    %1532 = vmatpush1.msra.mxu0 0.0
    %1533 = vmatprep.subr.mxu0 0.0
    %1534 = vmatpush1.msra.mxu0 0.0
    %1535 = vmatprep.subr.mxu0 0.0
    %1536 = vmatpush1.msra.mxu0 0.0
    %1537 = vmatprep.subr.mxu0 0.0
    %1538 = vmatpush1.msra.mxu0 0.0
    %1539 = vmatprep.subr.mxu0 0.0
    %1540 = vmatpush1.msra.mxu0 0.0
    %1541 = vmatprep.subr.mxu0 0.0
    %1542 = vmatpush1.msra.mxu0 0.0
    %1543 = vmatprep.subr.mxu0 0.0
    %1544 = vmatpush1.msra.mxu0 0.0
    %1545 = vmatprep.subr.mxu0 0.0
    %1546 = vmatpush1.msra.mxu0 0.0
    %1547 = vmatprep.subr.mxu0 0.0
    %1548 = vmatpush1.msra.mxu0 0.0
    %1549 = vmatprep.subr.mxu0 0.0
    %1550 = vmatpush1.msra.mxu0 0.0
    %1551 = vmatprep.subr.mxu0 0.0
    %1552 = vmatpush1.msra.mxu0 0.0
    %1553 = vmatprep.subr.mxu0 0.0
    %1554 = vmatpush1.msra.mxu0 0.0
    %1555 = vmatprep.subr.mxu0 0.0
    %1556 = vmatpush1.msra.mxu0 0.0
    %1557 = vmatprep.subr.mxu0 0.0
    %1558 = vmatpush1.msra.mxu0 0.0
    %1559 = vmatprep.subr.mxu0 0.0
    %1560 = vmatpush1.msra.mxu0 0.0
    %1561 = vmatprep.subr.mxu0 0.0
    %1562 = vmatpush1.msra.mxu0 0.0
    %1563 = vmatprep.subr.mxu0 0.0
    %1564 = vmatpush1.msra.mxu0 0.0
    %1565 = vmatprep.subr.mxu0 0.0
    %1566 = vmatpush1.msra.mxu0 0.0
    %1567 = vmatprep.subr.mxu0 0.0
    %1568 = vmatpush1.msra.mxu0 0.0
    %1569 = vmatprep.subr.mxu0 0.0
    %1570 = vmatpush1.msra.mxu0 0.0
    %1571 = vmatprep.subr.mxu0 0.0
    %1572 = vmatpush1.msra.mxu0 0.0
    %1573 = vmatprep.subr.mxu0 0.0
    %1574 = vmatpush1.msra.mxu0 0.0
    %1575 = vmatprep.mubr.f32.mxu0 0.0
    %1576 = vmatmul.mubr.f32.gmra.mrb[0].mxu0 %v120
    %v1577 = vpop.f32.mrb[0].mxu0
    %v1578 = vadd.f32 %v101, %v1577
    %v1579 = vpop.f32.mrb[0].mxu0
    %v1580 = vadd.f32 %v101, %v1579
    %1581 = vmatprep.mubr.f32.mxu0 0.0
    %1582 = vmatmul.mubr.f32.gmra.mrb[0].mxu0 %v123
    %v1583 = vpop.f32.mrb[0].mxu0
    %v1584 = vadd.f32 %v106, %v1583
    %v1585 = vpop.f32.mrb[0].mxu0
    %v1586 = vadd.f32 %v106, %v1585
    %1587 = vmatprep.mubr.f32.mxu0 0.0
    %1588 = vmatmul.mubr.f32.gmra.mrb[0].mxu0 %v126
    %v1589 = vpop.f32.mrb[0].mxu0
    %v1590 = vadd.f32 %v111, %v1589
    %v1591 = vpop.f32.mrb[0].mxu0
    %v1592 = vadd.f32 %v111, %v1591
    %1593 = vmatprep.mubr.f32.mxu0 0.0
    %1594 = vmatmul.mubr.f32.gmra.mrb[0].mxu0 %v129
    %v1595 = vpop.f32.mrb[0].mxu0
    %v1596 = vadd.f32 %v116, %v1595
    %v1597 = vpop.f32.mrb[0].mxu0
    %v1598 = vadd.f32 %v116, %v1597
    %1599 = vdwg.mxu0
    %v1600 = vmax.f32 %v1578, 0.0
    %v1601 = vmax.f32 %v1580, 0.0
    %v1602 = vmax.f32 %v1584, 0.0
    %v1603 = vmax.f32 %v1586, 0.0
    %v1604 = vmax.f32 %v1590, 0.0
    %v1605 = vmax.f32 %v1592, 0.0
    %v1606 = vmax.f32 %v1596, 0.0
    %v1607 = vmax.f32 %v1598, 0.0
    %1608 = vmatprep.subr.mxu0 %v1601
    %1609 = vmatpush1.msra.mxu0 %v1600
    %1610 = vmatprep.subr.mxu0 %v1603
    %1611 = vmatpush1.msra.mxu0 %v1602
    %1612 = vmatprep.subr.mxu0 %v1605
    %1613 = vmatpush1.msra.mxu0 %v1604
    %1614 = vmatprep.subr.mxu0 %v1607
    %1615 = vmatpush1.msra.mxu0 %v1606
    %1616 = vmatprep.subr.mxu0 0.0
    %1617 = vmatpush1.msra.mxu0 0.0
    %1618 = vmatprep.subr.mxu0 0.0
    %1619 = vmatpush1.msra.mxu0 0.0
    %1620 = vmatprep.subr.mxu0 0.0
    %1621 = vmatpush1.msra.mxu0 0.0
    %1622 = vmatprep.subr.mxu0 0.0
    %1623 = vmatpush1.msra.mxu0 0.0
    %1624 = vmatprep.subr.mxu0 0.0
    %1625 = vmatpush1.msra.mxu0 0.0
    %1626 = vmatprep.subr.mxu0 0.0
    %1627 = vmatpush1.msra.mxu0 0.0
    %1628 = vmatprep.subr.mxu0 0.0
    %1629 = vmatpush1.msra.mxu0 0.0
    %1630 = vmatprep.subr.mxu0 0.0
    %1631 = vmatpush1.msra.mxu0 0.0
    %1632 = vmatprep.subr.mxu0 0.0
    %1633 = vmatpush1.msra.mxu0 0.0
    %1634 = vmatprep.subr.mxu0 0.0
    %1635 = vmatpush1.msra.mxu0 0.0
    %1636 = vmatprep.subr.mxu0 0.0
    %1637 = vmatpush1.msra.mxu0 0.0
    %1638 = vmatprep.subr.mxu0 0.0
    %1639 = vmatpush1.msra.mxu0 0.0
    %1640 = vmatprep.subr.mxu0 0.0
    %1641 = vmatpush1.msra.mxu0 0.0
    %1642 = vmatprep.subr.mxu0 0.0
    %1643 = vmatpush1.msra.mxu0 0.0
    %1644 = vmatprep.subr.mxu0 0.0
    %1645 = vmatpush1.msra.mxu0 0.0
    %1646 = vmatprep.subr.mxu0 0.0
    %1647 = vmatpush1.msra.mxu0 0.0
    %1648 = vmatprep.subr.mxu0 0.0
    %1649 = vmatpush1.msra.mxu0 0.0
    %1650 = vmatprep.subr.mxu0 0.0
    %1651 = vmatpush1.msra.mxu0 0.0
    %1652 = vmatprep.subr.mxu0 0.0
    %1653 = vmatpush1.msra.mxu0 0.0
    %1654 = vmatprep.subr.mxu0 0.0
    %1655 = vmatpush1.msra.mxu0 0.0
    %1656 = vmatprep.subr.mxu0 0.0
    %1657 = vmatpush1.msra.mxu0 0.0
    %1658 = vmatprep.subr.mxu0 0.0
    %1659 = vmatpush1.msra.mxu0 0.0
    %1660 = vmatprep.subr.mxu0 0.0
    %1661 = vmatpush1.msra.mxu0 0.0
    %1662 = vmatprep.subr.mxu0 0.0
    %1663 = vmatpush1.msra.mxu0 0.0
    %1664 = vmatprep.subr.mxu0 0.0
    %1665 = vmatpush1.msra.mxu0 0.0
    %1666 = vmatprep.subr.mxu0 0.0
    %1667 = vmatpush1.msra.mxu0 0.0
    %1668 = vmatprep.subr.mxu0 0.0
    %1669 = vmatpush1.msra.mxu0 0.0
    %1670 = vmatprep.subr.mxu0 0.0
    %1671 = vmatpush1.msra.mxu0 0.0
    %1672 = vmatprep.mubr.f32.mxu0 0.0
    %1673 = vmatmul.mubr.f32.gmra.mrb[0].mxu0 %v249
    %v1674 = vpop.f32.mrb[0].mxu0
    %v1675 = vadd.f32 %v231, %v1674
    %v1676 = vpop.f32.mrb[0].mxu0
    %v1677 = vadd.f32 %v231, %v1676
    %1678 = vmatprep.mubr.f32.mxu0 0.0
    %1679 = vmatmul.mubr.f32.gmra.mrb[0].mxu0 %v252
    %v1680 = vpop.f32.mrb[0].mxu0
    %v1681 = vadd.f32 %v236, %v1680
    %v1682 = vpop.f32.mrb[0].mxu0
    %v1683 = vadd.f32 %v236, %v1682
    %1684 = vmatprep.mubr.f32.mxu0 0.0
    %1685 = vmatmul.mubr.f32.gmra.mrb[0].mxu0 %v255
    %v1686 = vpop.f32.mrb[0].mxu0
    %v1687 = vadd.f32 %v241, %v1686
    %v1688 = vpop.f32.mrb[0].mxu0
    %v1689 = vadd.f32 %v241, %v1688
    %1690 = vmatprep.mubr.f32.mxu0 0.0
    %1691 = vmatmul.mubr.f32.gmra.mrb[0].mxu0 %v258
    %v1692 = vpop.f32.mrb[0].mxu0
    %v1693 = vadd.f32 %v246, %v1692
    %v1694 = vpop.f32.mrb[0].mxu0
    %v1695 = vadd.f32 %v246, %v1694
    %1696 = vdwg.mxu0
    %v1697 = vmax.f32 %v1675, 0.0
    %v1698 = vmax.f32 %v1677, 0.0
    %v1699 = vmax.f32 %v1681, 0.0
    %v1700 = vmax.f32 %v1683, 0.0
    %v1701 = vmax.f32 %v1687, 0.0
    %v1702 = vmax.f32 %v1689, 0.0
    %v1703 = vmax.f32 %v1693, 0.0
    %v1704 = vmax.f32 %v1695, 0.0
    %s1705 = scalar_lea.vmem [#allocation3], 192
    %1706 = vst [vmem:[%s1705] sm:$0xff] %v1697
    %1707 = vst [vmem:[%s1705 + $0x8] sm:$0xff] %v1698
    %1708 = vst [vmem:[%s1705 + $0x10] sm:$0xff] %v1699
    %1709 = vst [vmem:[%s1705 + $0x18] sm:$0xff] %v1700
    %1710 = vst [vmem:[%s1705 + $0x20] sm:$0xff] %v1701
    %1711 = vst [vmem:[%s1705 + $0x28] sm:$0xff] %v1702
    %1712 = vst [vmem:[%s1705 + $0x30] sm:$0xff] %v1703
    %1713 = vst [vmem:[%s1705 + $0x38] sm:$0xff] %v1704
    %1714 = vmatprep.subr.mxu0 %v1698
    %1715 = vmatpush1.msra.mxu0 %v1697
    %1716 = vmatprep.subr.mxu0 %v1700
    %1717 = vmatpush1.msra.mxu0 %v1699
    %1718 = vmatprep.subr.mxu0 %v1702
    %1719 = vmatpush1.msra.mxu0 %v1701
    %1720 = vmatprep.subr.mxu0 %v1704
    %1721 = vmatpush1.msra.mxu0 %v1703
    %1722 = vmatprep.subr.mxu0 0.0
    %1723 = vmatpush1.msra.mxu0 0.0
    %1724 = vmatprep.subr.mxu0 0.0
    %1725 = vmatpush1.msra.mxu0 0.0
    %1726 = vmatprep.subr.mxu0 0.0
    %1727 = vmatpush1.msra.mxu0 0.0
    %1728 = vmatprep.subr.mxu0 0.0
    %1729 = vmatpush1.msra.mxu0 0.0
    %1730 = vmatprep.subr.mxu0 0.0
    %1731 = vmatpush1.msra.mxu0 0.0
    %1732 = vmatprep.subr.mxu0 0.0
    %1733 = vmatpush1.msra.mxu0 0.0
    %1734 = vmatprep.subr.mxu0 0.0
    %1735 = vmatpush1.msra.mxu0 0.0
    %1736 = vmatprep.subr.mxu0 0.0
    %1737 = vmatpush1.msra.mxu0 0.0
    %1738 = vmatprep.subr.mxu0 0.0
    %1739 = vmatpush1.msra.mxu0 0.0
    %1740 = vmatprep.subr.mxu0 0.0
    %1741 = vmatpush1.msra.mxu0 0.0
    %1742 = vmatprep.subr.mxu0 0.0
    %1743 = vmatpush1.msra.mxu0 0.0
    %1744 = vmatprep.subr.mxu0 0.0
    %1745 = vmatpush1.msra.mxu0 0.0
    %1746 = vmatprep.subr.mxu0 0.0
    %1747 = vmatpush1.msra.mxu0 0.0
    %1748 = vmatprep.subr.mxu0 0.0
    %1749 = vmatpush1.msra.mxu0 0.0
    %1750 = vmatprep.subr.mxu0 0.0
    %1751 = vmatpush1.msra.mxu0 0.0
    %1752 = vmatprep.subr.mxu0 0.0
    %1753 = vmatpush1.msra.mxu0 0.0
    %1754 = vmatprep.subr.mxu0 0.0
    %1755 = vmatpush1.msra.mxu0 0.0
    %1756 = vmatprep.subr.mxu0 0.0
    %1757 = vmatpush1.msra.mxu0 0.0
    %1758 = vmatprep.subr.mxu0 0.0
    %1759 = vmatpush1.msra.mxu0 0.0
    %1760 = vmatprep.subr.mxu0 0.0
    %1761 = vmatpush1.msra.mxu0 0.0
    %1762 = vmatprep.subr.mxu0 0.0
    %1763 = vmatpush1.msra.mxu0 0.0
    %1764 = vmatprep.subr.mxu0 0.0
    %1765 = vmatpush1.msra.mxu0 0.0
    %1766 = vmatprep.subr.mxu0 0.0
    %1767 = vmatpush1.msra.mxu0 0.0
    %1768 = vmatprep.subr.mxu0 0.0
    %1769 = vmatpush1.msra.mxu0 0.0
    %1770 = vmatprep.subr.mxu0 0.0
    %1771 = vmatpush1.msra.mxu0 0.0
    %1772 = vmatprep.subr.mxu0 0.0
    %1773 = vmatpush1.msra.mxu0 0.0
    %1774 = vmatprep.subr.mxu0 0.0
    %1775 = vmatpush1.msra.mxu0 0.0
    %1776 = vmatprep.subr.mxu0 0.0
    %1777 = vmatpush1.msra.mxu0 0.0
    %1778 = vmatprep.mubr.f32.mxu0 0.0
    %1779 = vmatmul.mubr.f32.gmra.mrb[0].mxu0 %v406
    %v1780 = vpop.f32.mrb[0].mxu0
    %v1781 = vadd.f32 %v368, %v1780
    %v1782 = vpop.f32.mrb[0].mxu0
    %v1783 = vadd.f32 %v368, %v1782
    %1784 = vmatprep.mubr.f32.mxu0 0.0
    %1785 = vmatmul.mubr.f32.gmra.mrb[0].mxu0 %v409
    %v1786 = vpop.f32.mrb[0].mxu0
    %v1787 = vadd.f32 %v373, %v1786
    %v1788 = vpop.f32.mrb[0].mxu0
    %v1789 = vadd.f32 %v373, %v1788
    %1790 = vmatprep.mubr.f32.mxu0 0.0
    %1791 = vmatmul.mubr.f32.gmra.mrb[0].mxu0 %v412
    %v1792 = vpop.f32.mrb[0].mxu0
    %v1793 = vadd.f32 %v378, %v1792
    %v1794 = vpop.f32.mrb[0].mxu0
    %v1795 = vadd.f32 %v378, %v1794
    %1796 = vmatprep.mubr.f32.mxu0 0.0
    %1797 = vmatmul.mubr.f32.gmra.mrb[0].mxu0 %v415
    %v1798 = vpop.f32.mrb[0].mxu0
    %v1799 = vadd.f32 %v383, %v1798
    %v1800 = vpop.f32.mrb[0].mxu0
    %v1801 = vadd.f32 %v383, %v1800
    %1802 = vmatprep.mubr.f32.mxu0 0.0
    %1803 = vmatmul.mubr.f32.gmra.mrb[0].mxu0 %v418
    %v1804 = vpop.f32.mrb[0].mxu0
    %v1805 = vadd.f32 %v388, %v1804
    %v1806 = vpop.f32.mrb[0].mxu0
    %v1807 = vadd.f32 %v388, %v1806
    %1808 = vmatprep.mubr.f32.mxu0 0.0
    %1809 = vmatmul.mubr.f32.gmra.mrb[0].mxu0 %v421
    %v1810 = vpop.f32.mrb[0].mxu0
    %v1811 = vadd.f32 %v393, %v1810
    %v1812 = vpop.f32.mrb[0].mxu0
    %v1813 = vadd.f32 %v393, %v1812
    %1814 = vmatprep.mubr.f32.mxu0 0.0
    %1815 = vmatmul.mubr.f32.gmra.mrb[0].mxu0 %v424
    %v1816 = vpop.f32.mrb[0].mxu0
    %v1817 = vadd.f32 %v398, %v1816
    %v1818 = vpop.f32.mrb[0].mxu0
    %v1819 = vadd.f32 %v398, %v1818
    %1820 = vmatprep.mubr.f32.mxu0 0.0
    %1821 = vmatmul.mubr.f32.gmra.mrb[0].mxu0 %v427
    %v1822 = vpop.f32.mrb[0].mxu0
    %v1823 = vadd.f32 %v403, %v1822
    %v1824 = vpop.f32.mrb[0].mxu0
    %v1825 = vadd.f32 %v403, %v1824
    %1826 = vdwg.mxu0
    %v1827 = vmax.f32 %v1781, 0.0
    %v1828 = vmax.f32 %v1783, 0.0
    %v1829 = vmax.f32 %v1787, 0.0
    %v1830 = vmax.f32 %v1789, 0.0
    %v1831 = vmax.f32 %v1793, 0.0
    %v1832 = vmax.f32 %v1795, 0.0
    %v1833 = vmax.f32 %v1799, 0.0
    %v1834 = vmax.f32 %v1801, 0.0
    %v1835 = vmax.f32 %v1805, 0.0
    %v1836 = vmax.f32 %v1807, 0.0
    %v1837 = vmax.f32 %v1811, 0.0
    %v1838 = vmax.f32 %v1813, 0.0
    %v1839 = vmax.f32 %v1817, 0.0
    %v1840 = vmax.f32 %v1819, 0.0
    %v1841 = vmax.f32 %v1823, 0.0
    %v1842 = vmax.f32 %v1825, 0.0
    %1843 = vmatprep.subr.mxu0 %v1828
    %1844 = vmatpush1.msra.mxu0 %v1827
    %1845 = vmatprep.subr.mxu0 %v1830
    %1846 = vmatpush1.msra.mxu0 %v1829
    %1847 = vmatprep.subr.mxu0 %v1832
    %1848 = vmatpush1.msra.mxu0 %v1831
    %1849 = vmatprep.subr.mxu0 %v1834
    %1850 = vmatpush1.msra.mxu0 %v1833
    %1851 = vmatprep.subr.mxu0 %v1836
    %1852 = vmatpush1.msra.mxu0 %v1835
    %1853 = vmatprep.subr.mxu0 %v1838
    %1854 = vmatpush1.msra.mxu0 %v1837
    %1855 = vmatprep.subr.mxu0 %v1840
    %1856 = vmatpush1.msra.mxu0 %v1839
    %1857 = vmatprep.subr.mxu0 %v1842
    %1858 = vmatpush1.msra.mxu0 %v1841
    %1859 = vmatprep.subr.mxu0 0.0
    %1860 = vmatpush1.msra.mxu0 0.0
    %1861 = vmatprep.subr.mxu0 0.0
    %1862 = vmatpush1.msra.mxu0 0.0
    %1863 = vmatprep.subr.mxu0 0.0
    %1864 = vmatpush1.msra.mxu0 0.0
    %1865 = vmatprep.subr.mxu0 0.0
    %1866 = vmatpush1.msra.mxu0 0.0
    %1867 = vmatprep.subr.mxu0 0.0
    %1868 = vmatpush1.msra.mxu0 0.0
    %1869 = vmatprep.subr.mxu0 0.0
    %1870 = vmatpush1.msra.mxu0 0.0
    %1871 = vmatprep.subr.mxu0 0.0
    %1872 = vmatpush1.msra.mxu0 0.0
    %1873 = vmatprep.subr.mxu0 0.0
    %1874 = vmatpush1.msra.mxu0 0.0
    %1875 = vmatprep.subr.mxu0 0.0
    %1876 = vmatpush1.msra.mxu0 0.0
    %1877 = vmatprep.subr.mxu0 0.0
    %1878 = vmatpush1.msra.mxu0 0.0
    %1879 = vmatprep.subr.mxu0 0.0
    %1880 = vmatpush1.msra.mxu0 0.0
    %1881 = vmatprep.subr.mxu0 0.0
    %1882 = vmatpush1.msra.mxu0 0.0
    %1883 = vmatprep.subr.mxu0 0.0
    %1884 = vmatpush1.msra.mxu0 0.0
    %1885 = vmatprep.subr.mxu0 0.0
    %1886 = vmatpush1.msra.mxu0 0.0
    %1887 = vmatprep.subr.mxu0 0.0
    %1888 = vmatpush1.msra.mxu0 0.0
    %1889 = vmatprep.subr.mxu0 0.0
    %1890 = vmatpush1.msra.mxu0 0.0
    %1891 = vmatprep.subr.mxu0 0.0
    %1892 = vmatpush1.msra.mxu0 0.0
    %1893 = vmatprep.subr.mxu0 0.0
    %1894 = vmatpush1.msra.mxu0 0.0
    %1895 = vmatprep.subr.mxu0 0.0
    %1896 = vmatpush1.msra.mxu0 0.0
    %1897 = vmatprep.subr.mxu0 0.0
    %1898 = vmatpush1.msra.mxu0 0.0
    %1899 = vmatprep.subr.mxu0 0.0
    %1900 = vmatpush1.msra.mxu0 0.0
    %1901 = vmatprep.subr.mxu0 0.0
    %1902 = vmatpush1.msra.mxu0 0.0
    %1903 = vmatprep.subr.mxu0 0.0
    %1904 = vmatpush1.msra.mxu0 0.0
    %1905 = vmatprep.subr.mxu0 0.0
    %1906 = vmatpush1.msra.mxu0 0.0
    %1907 = vmatprep.mubr.f32.mxu0 0.0
    %1908 = vmatmul.mubr.f32.gmra.mrb[0].mxu0 %v569
    %v1909 = vpop.f32.mrb[0].mxu0
    %v1910 = vadd.f32 %v566, %v1909
    %v1911 = vpop.f32.mrb[0].mxu0
    %v1912 = vadd.f32 %v566, %v1911
    %1913 = vdwg.mxu0
    %v1914 = vsub.f32 0.0, %v1910
    %v1915 = vsub.f32 0.0, %v1912
    %v1916 = vmul.f32 %v1914, 1.442695
    %v1917 = vpow.pop %v1916
    %v1918 = vmul.f32 %v1915, 1.442695
    %v1919 = vpow.pop %v1918
    %v1920 = vadd.f32 %v1917, 1.0
    %v1921 = vadd.f32 %v1919, 1.0
    %v1922 = vrcp.pop %v1920
    %v1923 = vmul.f32 1.0, %v1922
    %v1924 = vrcp.pop %v1921
    %v1925 = vmul.f32 1.0, %v1924
    %v1928 = vrot.slane %v1075, 7
    %v1929 = vrot.slane %v1077, 7
    %v1934 = vrot.slane %v1499, 6
    %v1935 = vrot.slane %v1501, 6
    %v1940 = vrot.slane %v1923, 5
    %v1941 = vrot.slane %v1925, 5
    %vm1944 = vcmask 1040384
    %v1945 = vsel %vm1944, %v651, %v1928
    %v1946 = vsel %vm1944, %v653, %v1929
    %vm1947 = vcmask 1041408
    %v1948 = vsel %vm1947, %v1945, %v1934
    %v1949 = vsel %vm1947, %v1946, %v1935
    %vm1950 = vcmask 1042432
    %v1951 = vsel %vm1950, %v1948, %v1940
    %v1952 = vsel %vm1950, %v1949, %v1941
    %v1953 = vld [vmem:[%s9] sm:$0xff]
    %v1954 = vld [vmem:[%s9 + $0x8] sm:$0xff]
    %v1955 = vld [vmem:[%s9 + $0x10] sm:$0xff]
    %v1956 = vld [vmem:[%s9 + $0x18] sm:$0xff]
    %v1957 = vld [vmem:[%s9 + $0x20] sm:$0xff]
    %v1958 = vld [vmem:[%s9 + $0x28] sm:$0xff]
    %v1959 = vld [vmem:[%s9 + $0x30] sm:$0xff]
    %v1960 = vld [vmem:[%s9 + $0x38] sm:$0xff]
    %v1961 = vld [vmem:[%s10] sm:$0xff]
    %v1962 = vld [vmem:[%s10 + $0x8] sm:$0xff]
    %v1963 = vld [vmem:[%s10 + $0x10] sm:$0xff]
    %v1964 = vld [vmem:[%s10 + $0x18] sm:$0xff]
    %v1965 = vld [vmem:[%s10 + $0x20] sm:$0xff]
    %v1966 = vld [vmem:[%s10 + $0x28] sm:$0xff]
    %v1967 = vld [vmem:[%s10 + $0x30] sm:$0xff]
    %v1968 = vld [vmem:[%s10 + $0x38] sm:$0xff]
    %1970 = vset.pattern.permute.xlu0 0
    %1971 = vperm.xlu0 %1970, %v1961
    %v1972 = vpop.permute.xlu0 %1971
    %1975 = vset.pattern.permute.xlu0 0
    %1976 = vperm.xlu0 %1975, %v1962
    %v1977 = vpop.permute.xlu0 %1976
    %1980 = vset.pattern.permute.xlu0 0
    %1981 = vperm.xlu0 %1980, %v1963
    %v1982 = vpop.permute.xlu0 %1981
    %1985 = vset.pattern.permute.xlu0 0
    %1986 = vperm.xlu0 %1985, %v1964
    %v1987 = vpop.permute.xlu0 %1986
    %1990 = vset.pattern.permute.xlu0 0
    %1991 = vperm.xlu0 %1990, %v1965
    %v1992 = vpop.permute.xlu0 %1991
    %1995 = vset.pattern.permute.xlu0 0
    %1996 = vperm.xlu0 %1995, %v1966
    %v1997 = vpop.permute.xlu0 %1996
    %2000 = vset.pattern.permute.xlu0 0
    %2001 = vperm.xlu0 %2000, %v1967
    %v2002 = vpop.permute.xlu0 %2001
    %2005 = vset.pattern.permute.xlu0 0
    %2006 = vperm.xlu0 %2005, %v1968
    %v2007 = vpop.permute.xlu0 %2006
    %vm2009 = vcmask 31744
    %v2011 = vsel %vm2009, %v1953, 0
    %v2014 = vsel %vm2009, %v1954, 0
    %v2017 = vsel %vm2009, %v1955, 0
    %v2020 = vsel %vm2009, %v1956, 0
    %v2023 = vsel %vm2009, %v1957, 0
    %v2026 = vsel %vm2009, %v1958, 0
    %v2029 = vsel %vm2009, %v1959, 0
    %v2032 = vsel %vm2009, %v1960, 0
    %vm2034 = vcmask 1043456
    %v2036 = vsel %vm2034, %v1951, 0
    %v2039 = vsel %vm2034, %v1952, 0
    %2041 = vmatprep.subr.mxu0 %v2039
    %2042 = vmatpush1.msra.mxu0 %v2036
    %2043 = vmatprep.subr.mxu0 0.0
    %2044 = vmatpush1.msra.mxu0 0.0
    %2045 = vmatprep.subr.mxu0 0.0
    %2046 = vmatpush1.msra.mxu0 0.0
    %2047 = vmatprep.subr.mxu0 0.0
    %2048 = vmatpush1.msra.mxu0 0.0
    %2049 = vmatprep.subr.mxu0 0.0
    %2050 = vmatpush1.msra.mxu0 0.0
    %2051 = vmatprep.subr.mxu0 0.0
    %2052 = vmatpush1.msra.mxu0 0.0
    %2053 = vmatprep.subr.mxu0 0.0
    %2054 = vmatpush1.msra.mxu0 0.0
    %2055 = vmatprep.subr.mxu0 0.0
    %2056 = vmatpush1.msra.mxu0 0.0
    %2057 = vmatprep.subr.mxu0 0.0
    %2058 = vmatpush1.msra.mxu0 0.0
    %2059 = vmatprep.subr.mxu0 0.0
    %2060 = vmatpush1.msra.mxu0 0.0
    %2061 = vmatprep.subr.mxu0 0.0
    %2062 = vmatpush1.msra.mxu0 0.0
    %2063 = vmatprep.subr.mxu0 0.0
    %2064 = vmatpush1.msra.mxu0 0.0
    %2065 = vmatprep.subr.mxu0 0.0
    %2066 = vmatpush1.msra.mxu0 0.0
    %2067 = vmatprep.subr.mxu0 0.0
    %2068 = vmatpush1.msra.mxu0 0.0
    %2069 = vmatprep.subr.mxu0 0.0
    %2070 = vmatpush1.msra.mxu0 0.0
    %2071 = vmatprep.subr.mxu0 0.0
    %2072 = vmatpush1.msra.mxu0 0.0
    %2073 = vmatprep.subr.mxu0 0.0
    %2074 = vmatpush1.msra.mxu0 0.0
    %2075 = vmatprep.subr.mxu0 0.0
    %2076 = vmatpush1.msra.mxu0 0.0
    %2077 = vmatprep.subr.mxu0 0.0
    %2078 = vmatpush1.msra.mxu0 0.0
    %2079 = vmatprep.subr.mxu0 0.0
    %2080 = vmatpush1.msra.mxu0 0.0
    %2081 = vmatprep.subr.mxu0 0.0
    %2082 = vmatpush1.msra.mxu0 0.0
    %2083 = vmatprep.subr.mxu0 0.0
    %2084 = vmatpush1.msra.mxu0 0.0
    %2085 = vmatprep.subr.mxu0 0.0
    %2086 = vmatpush1.msra.mxu0 0.0
    %2087 = vmatprep.subr.mxu0 0.0
    %2088 = vmatpush1.msra.mxu0 0.0
    %2089 = vmatprep.subr.mxu0 0.0
    %2090 = vmatpush1.msra.mxu0 0.0
    %2091 = vmatprep.subr.mxu0 0.0
    %2092 = vmatpush1.msra.mxu0 0.0
    %2093 = vmatprep.subr.mxu0 0.0
    %2094 = vmatpush1.msra.mxu0 0.0
    %2095 = vmatprep.subr.mxu0 0.0
    %2096 = vmatpush1.msra.mxu0 0.0
    %2097 = vmatprep.subr.mxu0 0.0
    %2098 = vmatpush1.msra.mxu0 0.0
    %2099 = vmatprep.subr.mxu0 0.0
    %2100 = vmatpush1.msra.mxu0 0.0
    %2101 = vmatprep.subr.mxu0 0.0
    %2102 = vmatpush1.msra.mxu0 0.0
    %2103 = vmatprep.subr.mxu0 0.0
    %2104 = vmatpush1.msra.mxu0 0.0
    %2105 = vmatprep.mubr.f32.mxu0 0.0
    %2106 = vmatmul.mubr.f32.gmra.mrb[0].mxu0 %v2011
    %v2107 = vpop.f32.mrb[0].mxu0
    %v2108 = vadd.f32 %v1972, %v2107
    %v2109 = vpop.f32.mrb[0].mxu0
    %v2110 = vadd.f32 %v1972, %v2109
    %2111 = vmatprep.mubr.f32.mxu0 0.0
    %2112 = vmatmul.mubr.f32.gmra.mrb[0].mxu0 %v2014
    %v2113 = vpop.f32.mrb[0].mxu0
    %v2114 = vadd.f32 %v1977, %v2113
    %v2115 = vpop.f32.mrb[0].mxu0
    %v2116 = vadd.f32 %v1977, %v2115
    %2117 = vmatprep.mubr.f32.mxu0 0.0
    %2118 = vmatmul.mubr.f32.gmra.mrb[0].mxu0 %v2017
    %v2119 = vpop.f32.mrb[0].mxu0
    %v2120 = vadd.f32 %v1982, %v2119
    %v2121 = vpop.f32.mrb[0].mxu0
    %v2122 = vadd.f32 %v1982, %v2121
    %2123 = vmatprep.mubr.f32.mxu0 0.0
    %2124 = vmatmul.mubr.f32.gmra.mrb[0].mxu0 %v2020
    %v2125 = vpop.f32.mrb[0].mxu0
    %v2126 = vadd.f32 %v1987, %v2125
    %v2127 = vpop.f32.mrb[0].mxu0
    %v2128 = vadd.f32 %v1987, %v2127
    %2129 = vmatprep.mubr.f32.mxu0 0.0
    %2130 = vmatmul.mubr.f32.gmra.mrb[0].mxu0 %v2023
    %v2131 = vpop.f32.mrb[0].mxu0
    %v2132 = vadd.f32 %v1992, %v2131
    %v2133 = vpop.f32.mrb[0].mxu0
    %v2134 = vadd.f32 %v1992, %v2133
    %2135 = vmatprep.mubr.f32.mxu0 0.0
    %2136 = vmatmul.mubr.f32.gmra.mrb[0].mxu0 %v2026
    %v2137 = vpop.f32.mrb[0].mxu0
    %v2138 = vadd.f32 %v1997, %v2137
    %v2139 = vpop.f32.mrb[0].mxu0
    %v2140 = vadd.f32 %v1997, %v2139
    %2141 = vmatprep.mubr.f32.mxu0 0.0
    %2142 = vmatmul.mubr.f32.gmra.mrb[0].mxu0 %v2029
    %v2143 = vpop.f32.mrb[0].mxu0
    %v2144 = vadd.f32 %v2002, %v2143
    %v2145 = vpop.f32.mrb[0].mxu0
    %v2146 = vadd.f32 %v2002, %v2145
    %2147 = vmatprep.mubr.f32.mxu0 0.0
    %2148 = vmatmul.mubr.f32.gmra.mrb[0].mxu0 %v2032
    %v2149 = vpop.f32.mrb[0].mxu0
    %v2150 = vadd.f32 %v2007, %v2149
    %v2151 = vpop.f32.mrb[0].mxu0
    %v2152 = vadd.f32 %v2007, %v2151
    %2153 = vdwg.mxu0
    %v2154 = vmax.f32 %v2108, 0.0
    %v2155 = vmax.f32 %v2110, 0.0
    %v2156 = vmax.f32 %v2114, 0.0
    %v2157 = vmax.f32 %v2116, 0.0
    %v2158 = vmax.f32 %v2120, 0.0
    %v2159 = vmax.f32 %v2122, 0.0
    %v2160 = vmax.f32 %v2126, 0.0
    %v2161 = vmax.f32 %v2128, 0.0
    %v2162 = vmax.f32 %v2132, 0.0
    %v2163 = vmax.f32 %v2134, 0.0
    %v2164 = vmax.f32 %v2138, 0.0
    %v2165 = vmax.f32 %v2140, 0.0
    %v2166 = vmax.f32 %v2144, 0.0
    %v2167 = vmax.f32 %v2146, 0.0
    %v2168 = vmax.f32 %v2150, 0.0
    %v2169 = vmax.f32 %v2152, 0.0
    %v2170 = vld [vmem:[%s11] sm:$0xff]
    %v2171 = vld [vmem:[%s11 + $0x8] sm:$0xff]
    %v2172 = vld [vmem:[%s11 + $0x10] sm:$0xff]
    %v2173 = vld [vmem:[%s11 + $0x18] sm:$0xff]
    %v2174 = vld [vmem:[%s11 + $0x20] sm:$0xff]
    %v2175 = vld [vmem:[%s11 + $0x28] sm:$0xff]
    %v2176 = vld [vmem:[%s11 + $0x30] sm:$0xff]
    %v2177 = vld [vmem:[%s11 + $0x38] sm:$0xff]
    %v2178 = vld [vmem:[%s12] sm:$0xff]
    %v2179 = vld [vmem:[%s12 + $0x8] sm:$0xff]
    %v2180 = vld [vmem:[%s12 + $0x10] sm:$0xff]
    %v2181 = vld [vmem:[%s12 + $0x18] sm:$0xff]
    %v2182 = vld [vmem:[%s12 + $0x20] sm:$0xff]
    %v2183 = vld [vmem:[%s12 + $0x28] sm:$0xff]
    %v2184 = vld [vmem:[%s12 + $0x30] sm:$0xff]
    %v2185 = vld [vmem:[%s12 + $0x38] sm:$0xff]
    %2187 = vset.pattern.permute.xlu0 0
    %2188 = vperm.xlu0 %2187, %v2178
    %v2189 = vpop.permute.xlu0 %2188
    %2192 = vset.pattern.permute.xlu0 0
    %2193 = vperm.xlu0 %2192, %v2179
    %v2194 = vpop.permute.xlu0 %2193
    %2197 = vset.pattern.permute.xlu0 0
    %2198 = vperm.xlu0 %2197, %v2180
    %v2199 = vpop.permute.xlu0 %2198
    %2202 = vset.pattern.permute.xlu0 0
    %2203 = vperm.xlu0 %2202, %v2181
    %v2204 = vpop.permute.xlu0 %2203
    %2207 = vset.pattern.permute.xlu0 0
    %2208 = vperm.xlu0 %2207, %v2182
    %v2209 = vpop.permute.xlu0 %2208
    %2212 = vset.pattern.permute.xlu0 0
    %2213 = vperm.xlu0 %2212, %v2183
    %v2214 = vpop.permute.xlu0 %2213
    %2217 = vset.pattern.permute.xlu0 0
    %2218 = vperm.xlu0 %2217, %v2184
    %v2219 = vpop.permute.xlu0 %2218
    %2222 = vset.pattern.permute.xlu0 0
    %2223 = vperm.xlu0 %2222, %v2185
    %v2224 = vpop.permute.xlu0 %2223
    %v2227 = vsel %vm567, %v2170, 0
    %v2230 = vsel %vm567, %v2171, 0
    %v2233 = vsel %vm567, %v2172, 0
    %v2236 = vsel %vm567, %v2173, 0
    %v2239 = vsel %vm567, %v2174, 0
    %v2242 = vsel %vm567, %v2175, 0
    %v2245 = vsel %vm567, %v2176, 0
    %v2248 = vsel %vm567, %v2177, 0
    %2250 = vmatprep.subr.mxu0 %v2155
    %2251 = vmatpush1.msra.mxu0 %v2154
    %2252 = vmatprep.subr.mxu0 %v2157
    %2253 = vmatpush1.msra.mxu0 %v2156
    %2254 = vmatprep.subr.mxu0 %v2159
    %2255 = vmatpush1.msra.mxu0 %v2158
    %2256 = vmatprep.subr.mxu0 %v2161
    %2257 = vmatpush1.msra.mxu0 %v2160
    %2258 = vmatprep.subr.mxu0 %v2163
    %2259 = vmatpush1.msra.mxu0 %v2162
    %2260 = vmatprep.subr.mxu0 %v2165
    %2261 = vmatpush1.msra.mxu0 %v2164
    %2262 = vmatprep.subr.mxu0 %v2167
    %2263 = vmatpush1.msra.mxu0 %v2166
    %2264 = vmatprep.subr.mxu0 %v2169
    %2265 = vmatpush1.msra.mxu0 %v2168
    %2266 = vmatprep.subr.mxu0 0.0
    %2267 = vmatpush1.msra.mxu0 0.0
    %2268 = vmatprep.subr.mxu0 0.0
    %2269 = vmatpush1.msra.mxu0 0.0
    %2270 = vmatprep.subr.mxu0 0.0
    %2271 = vmatpush1.msra.mxu0 0.0
    %2272 = vmatprep.subr.mxu0 0.0
    %2273 = vmatpush1.msra.mxu0 0.0
    %2274 = vmatprep.subr.mxu0 0.0
    %2275 = vmatpush1.msra.mxu0 0.0
    %2276 = vmatprep.subr.mxu0 0.0
    %2277 = vmatpush1.msra.mxu0 0.0
    %2278 = vmatprep.subr.mxu0 0.0
    %2279 = vmatpush1.msra.mxu0 0.0
    %2280 = vmatprep.subr.mxu0 0.0
    %2281 = vmatpush1.msra.mxu0 0.0
    %2282 = vmatprep.subr.mxu0 0.0
    %2283 = vmatpush1.msra.mxu0 0.0
    %2284 = vmatprep.subr.mxu0 0.0
    %2285 = vmatpush1.msra.mxu0 0.0
    %2286 = vmatprep.subr.mxu0 0.0
    %2287 = vmatpush1.msra.mxu0 0.0
    %2288 = vmatprep.subr.mxu0 0.0
    %2289 = vmatpush1.msra.mxu0 0.0
    %2290 = vmatprep.subr.mxu0 0.0
    %2291 = vmatpush1.msra.mxu0 0.0
    %2292 = vmatprep.subr.mxu0 0.0
    %2293 = vmatpush1.msra.mxu0 0.0
    %2294 = vmatprep.subr.mxu0 0.0
    %2295 = vmatpush1.msra.mxu0 0.0
    %2296 = vmatprep.subr.mxu0 0.0
    %2297 = vmatpush1.msra.mxu0 0.0
    %2298 = vmatprep.subr.mxu0 0.0
    %2299 = vmatpush1.msra.mxu0 0.0
    %2300 = vmatprep.subr.mxu0 0.0
    %2301 = vmatpush1.msra.mxu0 0.0
    %2302 = vmatprep.subr.mxu0 0.0
    %2303 = vmatpush1.msra.mxu0 0.0
    %2304 = vmatprep.subr.mxu0 0.0
    %2305 = vmatpush1.msra.mxu0 0.0
    %2306 = vmatprep.subr.mxu0 0.0
    %2307 = vmatpush1.msra.mxu0 0.0
    %2308 = vmatprep.subr.mxu0 0.0
    %2309 = vmatpush1.msra.mxu0 0.0
    %2310 = vmatprep.subr.mxu0 0.0
    %2311 = vmatpush1.msra.mxu0 0.0
    %2312 = vmatprep.subr.mxu0 0.0
    %2313 = vmatpush1.msra.mxu0 0.0
    %2314 = vmatprep.mubr.f32.mxu0 0.0
    %2315 = vmatmul.mubr.f32.gmra.mrb[0].mxu0 %v2227
    %v2316 = vpop.f32.mrb[0].mxu0
    %v2317 = vadd.f32 %v2189, %v2316
    %v2318 = vpop.f32.mrb[0].mxu0
    %v2319 = vadd.f32 %v2189, %v2318
    %2320 = vmatprep.mubr.f32.mxu0 0.0
    %2321 = vmatmul.mubr.f32.gmra.mrb[0].mxu0 %v2230
    %v2322 = vpop.f32.mrb[0].mxu0
    %v2323 = vadd.f32 %v2194, %v2322
    %v2324 = vpop.f32.mrb[0].mxu0
    %v2325 = vadd.f32 %v2194, %v2324
    %2326 = vmatprep.mubr.f32.mxu0 0.0
    %2327 = vmatmul.mubr.f32.gmra.mrb[0].mxu0 %v2233
    %v2328 = vpop.f32.mrb[0].mxu0
    %v2329 = vadd.f32 %v2199, %v2328
    %v2330 = vpop.f32.mrb[0].mxu0
    %v2331 = vadd.f32 %v2199, %v2330
    %2332 = vmatprep.mubr.f32.mxu0 0.0
    %2333 = vmatmul.mubr.f32.gmra.mrb[0].mxu0 %v2236
    %v2334 = vpop.f32.mrb[0].mxu0
    %v2335 = vadd.f32 %v2204, %v2334
    %v2336 = vpop.f32.mrb[0].mxu0
    %v2337 = vadd.f32 %v2204, %v2336
    %2338 = vmatprep.mubr.f32.mxu0 0.0
    %2339 = vmatmul.mubr.f32.gmra.mrb[0].mxu0 %v2239
    %v2340 = vpop.f32.mrb[0].mxu0
    %v2341 = vadd.f32 %v2209, %v2340
    %v2342 = vpop.f32.mrb[0].mxu0
    %v2343 = vadd.f32 %v2209, %v2342
    %2344 = vmatprep.mubr.f32.mxu0 0.0
    %2345 = vmatmul.mubr.f32.gmra.mrb[0].mxu0 %v2242
    %v2346 = vpop.f32.mrb[0].mxu0
    %v2347 = vadd.f32 %v2214, %v2346
    %v2348 = vpop.f32.mrb[0].mxu0
    %v2349 = vadd.f32 %v2214, %v2348
    %2350 = vmatprep.mubr.f32.mxu0 0.0
    %2351 = vmatmul.mubr.f32.gmra.mrb[0].mxu0 %v2245
    %v2352 = vpop.f32.mrb[0].mxu0
    %v2353 = vadd.f32 %v2219, %v2352
    %v2354 = vpop.f32.mrb[0].mxu0
    %v2355 = vadd.f32 %v2219, %v2354
    %2356 = vmatprep.mubr.f32.mxu0 0.0
    %2357 = vmatmul.mubr.f32.gmra.mrb[0].mxu0 %v2248
    %v2358 = vpop.f32.mrb[0].mxu0
    %v2359 = vadd.f32 %v2224, %v2358
    %v2360 = vpop.f32.mrb[0].mxu0
    %v2361 = vadd.f32 %v2224, %v2360
    %2362 = vdwg.mxu0
    %v2363 = vmax.f32 %v2317, 0.0
    %v2364 = vmax.f32 %v2319, 0.0
    %v2365 = vmax.f32 %v2323, 0.0
    %v2366 = vmax.f32 %v2325, 0.0
    %v2367 = vmax.f32 %v2329, 0.0
    %v2368 = vmax.f32 %v2331, 0.0
    %v2369 = vmax.f32 %v2335, 0.0
    %v2370 = vmax.f32 %v2337, 0.0
    %v2371 = vmax.f32 %v2341, 0.0
    %v2372 = vmax.f32 %v2343, 0.0
    %v2373 = vmax.f32 %v2347, 0.0
    %v2374 = vmax.f32 %v2349, 0.0
    %v2375 = vmax.f32 %v2353, 0.0
    %v2376 = vmax.f32 %v2355, 0.0
    %v2377 = vmax.f32 %v2359, 0.0
    %v2378 = vmax.f32 %v2361, 0.0
    %v2379 = vld [vmem:[%s13] sm:$0xf]
    %v2380 = vld [vmem:[%s14] sm:$0xf]
    %2382 = vset.pattern.permute.xlu0 0
    %2383 = vperm.xlu0 %2382, %v2380
    %v2384 = vpop.permute.xlu0 %2383
    %v2387 = vsel %vm567, %v2379, 0
    %2389 = vmatprep.subr.mxu0 %v2364
    %2390 = vmatpush1.msra.mxu0 %v2363
    %2391 = vmatprep.subr.mxu0 %v2366
    %2392 = vmatpush1.msra.mxu0 %v2365
    %2393 = vmatprep.subr.mxu0 %v2368
    %2394 = vmatpush1.msra.mxu0 %v2367
    %2395 = vmatprep.subr.mxu0 %v2370
    %2396 = vmatpush1.msra.mxu0 %v2369
    %2397 = vmatprep.subr.mxu0 %v2372
    %2398 = vmatpush1.msra.mxu0 %v2371
    %2399 = vmatprep.subr.mxu0 %v2374
    %2400 = vmatpush1.msra.mxu0 %v2373
    %2401 = vmatprep.subr.mxu0 %v2376
    %2402 = vmatpush1.msra.mxu0 %v2375
    %2403 = vmatprep.subr.mxu0 %v2378
    %2404 = vmatpush1.msra.mxu0 %v2377
    %2405 = vmatprep.subr.mxu0 0.0
    %2406 = vmatpush1.msra.mxu0 0.0
    %2407 = vmatprep.subr.mxu0 0.0
    %2408 = vmatpush1.msra.mxu0 0.0
    %2409 = vmatprep.subr.mxu0 0.0
    %2410 = vmatpush1.msra.mxu0 0.0
    %2411 = vmatprep.subr.mxu0 0.0
    %2412 = vmatpush1.msra.mxu0 0.0
    %2413 = vmatprep.subr.mxu0 0.0
    %2414 = vmatpush1.msra.mxu0 0.0
    %2415 = vmatprep.subr.mxu0 0.0
    %2416 = vmatpush1.msra.mxu0 0.0
    %2417 = vmatprep.subr.mxu0 0.0
    %2418 = vmatpush1.msra.mxu0 0.0
    %2419 = vmatprep.subr.mxu0 0.0
    %2420 = vmatpush1.msra.mxu0 0.0
    %2421 = vmatprep.subr.mxu0 0.0
    %2422 = vmatpush1.msra.mxu0 0.0
    %2423 = vmatprep.subr.mxu0 0.0
    %2424 = vmatpush1.msra.mxu0 0.0
    %2425 = vmatprep.subr.mxu0 0.0
    %2426 = vmatpush1.msra.mxu0 0.0
    %2427 = vmatprep.subr.mxu0 0.0
    %2428 = vmatpush1.msra.mxu0 0.0
    %2429 = vmatprep.subr.mxu0 0.0
    %2430 = vmatpush1.msra.mxu0 0.0
    %2431 = vmatprep.subr.mxu0 0.0
    %2432 = vmatpush1.msra.mxu0 0.0
    %2433 = vmatprep.subr.mxu0 0.0
    %2434 = vmatpush1.msra.mxu0 0.0
    %2435 = vmatprep.subr.mxu0 0.0
    %2436 = vmatpush1.msra.mxu0 0.0
    %2437 = vmatprep.subr.mxu0 0.0
    %2438 = vmatpush1.msra.mxu0 0.0
    %2439 = vmatprep.subr.mxu0 0.0
    %2440 = vmatpush1.msra.mxu0 0.0
    %2441 = vmatprep.subr.mxu0 0.0
    %2442 = vmatpush1.msra.mxu0 0.0
    %2443 = vmatprep.subr.mxu0 0.0
    %2444 = vmatpush1.msra.mxu0 0.0
    %2445 = vmatprep.subr.mxu0 0.0
    %2446 = vmatpush1.msra.mxu0 0.0
    %2447 = vmatprep.subr.mxu0 0.0
    %2448 = vmatpush1.msra.mxu0 0.0
    %2449 = vmatprep.subr.mxu0 0.0
    %2450 = vmatpush1.msra.mxu0 0.0
    %2451 = vmatprep.subr.mxu0 0.0
    %2452 = vmatpush1.msra.mxu0 0.0
    %2453 = vmatprep.mubr.f32.mxu0 0.0
    %2454 = vmatmul.mubr.f32.gmra.mrb[0].mxu0 %v2387
    %v2455 = vpop.f32.mrb[0].mxu0
    %v2456 = vadd.f32 %v2384, %v2455
    %v2457 = vpop.f32.mrb[0].mxu0
    %v2458 = vadd.f32 %v2384, %v2457
    %2459 = vdwg.mxu0
    %v2460 = vsub.f32 0.0, %v2456
    %v2461 = vsub.f32 0.0, %v2458
    %v2462 = vmul.f32 %v2460, 1.442695
    %v2463 = vpow.pop %v2462
    %v2464 = vmul.f32 %v2461, 1.442695
    %v2465 = vpow.pop %v2464
    %v2466 = vadd.f32 %v2463, 1.0
    %v2467 = vadd.f32 %v2465, 1.0
    %v2468 = vrcp.pop %v2466
    %v2469 = vmul.f32 1.0, %v2468
    %v2470 = vrcp.pop %v2467
    %v2471 = vmul.f32 1.0, %v2470
    %v2474 = vcombine.low %v2469, %v2471
    %2476 = vst [vmem:[#allocation5] sm:$0xff] %v2474
    // Predicated region
    $region62: #{tpu_custom_call.1} parent=1 // pred_check
      _
    $region63: #{tpu_custom_call.1} parent=1 // pred_check_branch
      %2478 = sbr.rel (0) target = $region65
    $region64: #{tpu_custom_call.1} parent=1 // pred_region
      %s2480 = ssub.s32 4096, 4096
      %2481 = vsyncadd [#allocation4], %s2480
      %s2482 = sshll.u32 [#allocation3], 4
      %s2483 = int_to_ptr.vmem [resolvable:$true] %s2482
      %2488 = dma.vmem_to_hbm [thread:$0]  %s2483, 4096, %s15, [#allocation4], 256, 256, 16
    $region65: #{tpu_custom_call.1} parent=1 // pred_fallthru
      _
    // Predicated region
    $region66: #{tpu_custom_call.1} parent=1 // pred_check
      _
    $region67: #{tpu_custom_call.1} parent=1 // pred_check_branch
      %2490 = sbr.rel (0) target = $region69
    $region68: #{tpu_custom_call.1} parent=1 // pred_region
      %s2492 = ssub.s32 128, 128
      %2493 = vsyncadd [#allocation6], %s2492
      %s2495 = sshll.u32 [#allocation5], 4
      %s2496 = int_to_ptr.vmem [resolvable:$true] %s2495
      %2498 = dma.vmem_to_hbm [thread:$0]  %s2496, 128, %s16, [#allocation6]
    $region69: #{tpu_custom_call.1} parent=1 // pred_fallthru
      _
    // Predicated region
    $region70: #{tpu_custom_call.1} parent=1 // pred_check
      _
    $region71: #{tpu_custom_call.1} parent=1 // pred_check_branch
      %2500 = sbr.rel (0) target = $region73
    $region72: #{tpu_custom_call.1} parent=1 // pred_region
      %2501 = dma.done [#allocation4], 4096
    $region73: #{tpu_custom_call.1} parent=1 // pred_fallthru
      _
    // Predicated region
    $region74: #{tpu_custom_call.1} parent=1 // pred_check
      _
    $region75: #{tpu_custom_call.1} parent=1 // pred_check_branch
      %2503 = sbr.rel (0) target = $region77
    $region76: #{tpu_custom_call.1} parent=1 // pred_region
      %2504 = dma.done [#allocation6], 128
    $region77: #{tpu_custom_call.1} parent=1 // pred_fallthru
      _
    %2505 = vsyncpa [#allocation4], 1
    %2506 = vsyncpa [#allocation6], 1

</llo_original>
